<compile_context>
chip_gen: v7x
topology: tpu7x:2x2x1
jax: 0.10.0
libtpu: 0.0.40
codegen_flags: <defaults>
</compile_context>

<pallas_src>
import functools

import jax
import jax.numpy as jnp
from jax import lax
from jax.experimental import pallas as pl
from jax.experimental.pallas import tpu as pltpu


# ----------------------------- fused Pallas kernel ---------------------------

def _seq2seq_fused_kernel(x_ref, ewih_ref, ebi_ref, ewhh_ref, ebhn_ref,
                          e2dw_ref, e2db_ref,
                          dwih_ref, dbi_ref, dwhh_ref, dbhn_ref,
                          outw_ref, outb_ref,
                          out_ref):
    """Fused Seq2Seq forward (everything resident in VMEM, single program).

    x_ref   : (B, T_in*D)          encoder input, batch-major, flattened
    ewih    : (T_in*D, T_in*3He)   block-diag kron(I_Tin, enc W_ih^T), gates [r|z|n]
    ebi     : (1, T_in*3He)        per-step [b_ir+b_hr | b_iz+b_hz | b_in], tiled T_in x
    ewhh    : (He, 3He)            enc W_hh^T, gate blocks [r|z|n] along lanes
    ebhn    : (1, He)              enc b_hn (kept separate: n = tanh(gi_n + r*(h Whn + b_hn)))
    e2dw    : (He, Hd), e2db: (1, Hd)   enc2dec hiddens Linear (identity activation)
    dwih    : (O, 3Hd)             dec W_ih^T, gate blocks [r|z|n]
    dbi     : (1, 3Hd)             dec [b_ir+b_hr | b_iz+b_hz | b_in]
    dwhh    : (Hd, 3Hd), dbhn: (1, Hd)  dec hidden weights / b_hn
    outw    : (T_out*Hd, T_out*O)  block-diag kron(I_Tout, out W^T)
    outb    : (1, T_out*O)         output bias, tiled T_out x
    out_ref : (B, T_out*O)         decoder outputs, batch-major, flattened
    """
    f32 = jnp.float32
    B = x_ref.shape[0]
    he = ewhh_ref.shape[0]
    hd = dwhh_ref.shape[0]
    o = dwih_ref.shape[0]
    t_out = outb_ref.shape[1] // o
    t_in = ebi_ref.shape[1] // (3 * he)
    d = x_ref.shape[1] // t_in

    # ---------------- encoder: ONE fused (block-diag) input projection --------------
    x_bm = x_ref[...]                                                    # (B, T_in*D)
    egi = jnp.dot(x_bm, ewih_ref[...], preferred_element_type=f32) + ebi_ref[...]
    # egi: (B, T_in*3He); block t = [gi_r | gi_z | gi_n] for step t, r/z/n biases folded.

    e_whh = ewhh_ref[...]                                                # (He, 3He)
    e_bhn = jnp.broadcast_to(ebhn_ref[...], (B, he))                     # hoisted broadcast

    # t = 0 peeled: h0 == 0, the hidden-side matmul vanishes.
    rz = jax.nn.sigmoid(egi[:, 0:2 * he])
    r = rz[:, :he]
    z = rz[:, he:]
    n = jnp.tanh(egi[:, 2 * he:3 * he] + r * e_bhn)
    h = (1.0 - z) * n

    for t in range(1, t_in):       # fully unrolled; ONE matmul per step on the serial path
        base = t * 3 * he
        gh = jnp.dot(h, e_whh, preferred_element_type=f32)               # (B, 3He)
        rz = jax.nn.sigmoid(egi[:, base:base + 2 * he] + gh[:, :2 * he])
        r = rz[:, :he]
        z = rz[:, he:]
        n = jnp.tanh(egi[:, base + 2 * he:base + 3 * he]
                     + r * (gh[:, 2 * he:] + e_bhn))
        h = (1.0 - z) * n + z * h

    # ---------------- enc2dec hiddens block (Linear, identity activation) -----------
    h = jnp.dot(h, e2dw_ref[...], preferred_element_type=f32) + e2db_ref[...]   # (B, Hd)

    # ---------------- decoder GRU ----------------------------------------------------
    d_whh = dwhh_ref[...]                                                # (Hd, 3Hd)
    d_bhn = jnp.broadcast_to(dbhn_ref[...], (B, hd))                     # hoisted broadcast
    dbi = dbi_ref[...]                                                   # (1, 3Hd)

    # Decoder input at t=0 = last encoder step truncated to O features (in-kernel slice,
    # no wrapper-side XLA op).  Inputs for t>0 are zero, so gi reduces to the bias.
    dx0 = x_bm[:, (t_in - 1) * d:(t_in - 1) * d + o]                     # (B, O)
    dgi0 = jnp.dot(dx0, dwih_ref[...], preferred_element_type=f32) + dbi  # (B, 3Hd)
    gi_rz_bias = jnp.broadcast_to(dbi[:, :2 * hd], (B, 2 * hd))          # hoisted, t>0
    gi_n_bias = jnp.broadcast_to(dbi[:, 2 * hd:], (B, hd))               # hoisted, t>0

    def dec_cell(gi_rz, gi_n, h_prev):
        gh = jnp.dot(h_prev, d_whh, preferred_element_type=f32)          # (B, 3Hd)
        rz_ = jax.nn.sigmoid(gi_rz + gh[:, :2 * hd])
        r_ = rz_[:, :hd]
        z_ = rz_[:, hd:]
        n_ = jnp.tanh(gi_n + r_ * (gh[:, 2 * hd:] + d_bhn))
        return (1.0 - z_) * n_ + z_ * h_prev

    h = dec_cell(dgi0[:, :2 * hd], dgi0[:, 2 * hd:], h)
    hs = [h]
    for _ in range(1, t_out):                                            # fully unrolled
        h = dec_cell(gi_rz_bias, gi_n_bias, h)
        hs.append(h)

    # ---------------- output head: hiddens kept in vregs, one block-diag matmul ------
    # Produces batch-major (B, T_out*O) directly -> no transpose anywhere.
    h_cat = jnp.concatenate(hs, axis=1)                                  # (B, T_out*Hd)
    out_ref[...] = (jnp.dot(h_cat, outw_ref[...], preferred_element_type=f32)
                    + outb_ref[...])


# ----------------------------- parameters -----------------------------------

def init_params(key, input_size, enc_hidden, dec_hidden, total_output_size):
    """PyTorch-layout params, uniform(-1/sqrt(H), 1/sqrt(H)) init, gate order [r, z, n]."""
    keys = jax.random.split(key, 12)

    def u(k, shape, scale):
        return jax.random.uniform(k, shape, jnp.float32, -scale, scale)

    se = 1.0 / (enc_hidden ** 0.5)
    sd = 1.0 / (dec_hidden ** 0.5)
    return {
        # encoder GRU (PyTorch layout: (3H, in), (3H, H), (3H,))
        'enc_w_ih': u(keys[0], (3 * enc_hidden, input_size), se),
        'enc_w_hh': u(keys[1], (3 * enc_hidden, enc_hidden), se),
        'enc_b_ih': u(keys[2], (3 * enc_hidden,), se),
        'enc_b_hh': u(keys[3], (3 * enc_hidden,), se),
        # enc2dec hiddens block: Linear(He -> Hd), identity activation
        'e2d_w': u(keys[4], (dec_hidden, enc_hidden), se),
        'e2d_b': u(keys[5], (dec_hidden,), se),
        # decoder GRU (input = total_output_size)
        'dec_w_ih': u(keys[6], (3 * dec_hidden, total_output_size), sd),
        'dec_w_hh': u(keys[7], (3 * dec_hidden, dec_hidden), sd),
        'dec_b_ih': u(keys[8], (3 * dec_hidden,), sd),
        'dec_b_hh': u(keys[9], (3 * dec_hidden,), sd),
        # decoder output head: Linear(Hd -> O)
        'out_w': u(keys[10], (total_output_size, dec_hidden), sd),
        'out_b': u(keys[11], (total_output_size,), sd),
    }


def _pack_gru(w_ih, w_hh, b_ih, b_hh):
    """PyTorch GRU layout -> lane-packed kernel layout.

    Returns:
      wih_cat: (in, 3H)  W_ih^T, gate column blocks [r | z | n]
      whh_cat: (H, 3H)   W_hh^T, gate column blocks [r | z | n]
      b_rzn  : (1, 3H)   [b_ir+b_hr | b_iz+b_hz | b_in]
      b_hn   : (1, H)
    """
    H = w_hh.shape[1]
    wih_cat = w_ih.T
    whh_cat = w_hh.T
    b_rzn = jnp.concatenate([b_ih[:H] + b_hh[:H],
                             b_ih[H:2 * H] + b_hh[H:2 * H],
                             b_ih[2 * H:3 * H]])[None, :]
    b_hn = b_hh[2 * H:3 * H][None, :]
    return wih_cat, whh_cat, b_rzn, b_hn


def pack_params(p, max_input_len, max_output_len):
    """Repack PyTorch-layout params into the fused-kernel layout (host side, done once)."""
    e_wih, e_whh, e_brzn, e_bhn = _pack_gru(p['enc_w_ih'], p['enc_w_hh'],
                                            p['enc_b_ih'], p['enc_b_hh'])
    d_wih, d_whh, d_brzn, d_bhn = _pack_gru(p['dec_w_ih'], p['dec_w_hh'],
                                            p['dec_b_ih'], p['dec_b_hh'])
    eye_in = jnp.eye(max_input_len, dtype=jnp.float32)
    eye_out = jnp.eye(max_output_len, dtype=jnp.float32)
    out_wT = p['out_w'].T                                      # (Hd, O)
    return {
        # encoder: block-diagonal input projection (one matmul for all T_in steps)
        'enc_wih_blk': jnp.kron(eye_in, e_wih),                # (T_in*D, T_in*3He)
        'enc_bi_blk': jnp.tile(e_brzn, (1, max_input_len)),    # (1, T_in*3He)
        'enc_whh': e_whh, 'enc_bhn': e_bhn,
        # enc2dec hiddens Linear
        'e2d_w': p['e2d_w'].T, 'e2d_b': p['e2d_b'][None, :],
        # decoder GRU
        'dec_wih': d_wih, 'dec_bi': d_brzn, 'dec_whh': d_whh, 'dec_bhn': d_bhn,
        # output head: block-diagonal -> batch-major output in one matmul
        'out_w_blk': jnp.kron(eye_out, out_wT),                # (T_out*Hd, T_out*O)
        'out_b_blk': jnp.tile(p['out_b'][None, :], (1, max_output_len)),
    }


# ----------------------------- forward --------------------------------------

@functools.partial(jax.jit, static_argnames=('max_output_len',))
def seq2seq_forward(packed, x, max_output_len):
    """Seq2SeqModel.forward.

    x: (B, T_in, input_size), batch-major (PyTorch convention).
    Returns (decoder_output: (B, max_output_len, total_output_size), hiddens=None).
    """
    B, T_in, D = x.shape
    O = packed['dec_wih'].shape[0]
    # dec input at t=0 truncates the last encoder step to its first O features
    # (matches the reference / PyTorch code path); silently wrong if O > D.
    assert O <= D, "total_output_size must be <= input_size for dec-input truncation"
    assert packed['enc_wih_blk'].shape[0] == T_in * D, "packed params built for other T_in"
    assert packed['out_b_blk'].shape[1] == max_output_len * O, \
        "packed params built for other max_output_len"

    x_flat = x.astype(jnp.float32).reshape(B, T_in * D)   # free reshape (batch-major kept)

    vmem = pl.BlockSpec(memory_space=pltpu.MemorySpace.VMEM)
    out_flat = pl.pallas_call(
        _seq2seq_fused_kernel,
        out_shape=jax.ShapeDtypeStruct((B, max_output_len * O), jnp.float32),
        in_specs=[vmem] * 13,
        out_specs=vmem,
    )(x_flat,
      packed['enc_wih_blk'], packed['enc_bi_blk'], packed['enc_whh'], packed['enc_bhn'],
      packed['e2d_w'], packed['e2d_b'],
      packed['dec_wih'], packed['dec_bi'], packed['dec_whh'], packed['dec_bhn'],
      packed['out_w_blk'], packed['out_b_blk'])

    decoder_output = out_flat.reshape(B, max_output_len, O)   # free reshape, no transpose
    # forward() returns the ORIGINAL `hiddens` argument (None here), not decoder hiddens.
    return decoder_output, None


# ----------------------------- pure-JAX reference ----------------------------

def reference_forward(params, x, max_output_len):
    """Pure-JAX (no Pallas) reference with exact PyTorch GRU semantics, for self-check."""
    x = x.astype(jnp.float32)
    B = x.shape[0]

    def gru(x_btd, h0, w_ih, w_hh, b_ih, b_hh):
        H = w_hh.shape[1]

        def cell(h, x_t):
            gi = x_t @ w_ih.T + b_ih
            gh = h @ w_hh.T + b_hh
            r = jax.nn.sigmoid(gi[:, :H] + gh[:, :H])
            z = jax.nn.sigmoid(gi[:, H:2 * H] + gh[:, H:2 * H])
            n = jnp.tanh(gi[:, 2 * H:] + r * gh[:, 2 * H:])
            h_new = (1.0 - z) * n + z * h
            return h_new, h_new

        hT, ys = lax.scan(cell, h0, jnp.transpose(x_btd, (1, 0, 2)))
        return jnp.transpose(ys, (1, 0, 2)), hT

    He = params['enc_w_hh'].shape[1]
    O = params['out_w'].shape[0]
    _, enc_hT = gru(x, jnp.zeros((B, He), jnp.float32),
                    params['enc_w_ih'], params['enc_w_hh'],
                    params['enc_b_ih'], params['enc_b_hh'])
    dec_h0 = enc_hT @ params['e2d_w'].T + params['e2d_b']
    dec_in = jnp.pad(x[:, -1:, :O], ((0, 0), (0, max_output_len - 1), (0, 0)))
    dec_y, _ = gru(dec_in, dec_h0,
                   params['dec_w_ih'], params['dec_w_hh'],
                   params['dec_b_ih'], params['dec_b_hh'])
    return dec_y @ params['out_w'].T + params['out_b']


# ----------------------------- main ------------------------------------------

if __name__ == "__main__":
    B = 2                 # batch
    T_IN = 8              # input sequence length
    INPUT_SIZE = 4        # encoder total_input_size
    ENC_HIDDEN = 32
    DEC_HIDDEN = 32
    TOTAL_OUTPUT_SIZE = 4
    MAX_OUTPUT_LEN = 4

    key = jax.random.PRNGKey(0)
    pkey, xkey = jax.random.split(key)
    params = init_params(pkey, INPUT_SIZE, ENC_HIDDEN, DEC_HIDDEN, TOTAL_OUTPUT_SIZE)
    packed = pack_params(params, T_IN, MAX_OUTPUT_LEN)
    x = jax.random.normal(xkey, (B, T_IN, INPUT_SIZE), jnp.float32)

    out, hiddens = seq2seq_forward(packed, x, MAX_OUTPUT_LEN)
    out = jax.block_until_ready(out)

    assert out.shape == (B, MAX_OUTPUT_LEN, TOTAL_OUTPUT_SIZE), out.shape
    assert hiddens is None
    assert bool(jnp.all(jnp.isfinite(out)))

    ref = reference_forward(params, x, MAX_OUTPUT_LEN)
    max_err = float(jnp.max(jnp.abs(out - ref)))
    assert jnp.allclose(out, ref, rtol=1e-5, atol=1e-5), f"max_err={max_err}"

    print("KERNEL_OK")
</pallas_src>

<mosaic_0001>
module attributes {stable_mosaic.version = 11 : i64} {
  func.func @_seq2seq_fused_kernel(%arg0: memref<2x32xf32, #tpu.memory_space<vmem>>, %arg1: memref<32x768xf32, #tpu.memory_space<vmem>>, %arg2: memref<1x768xf32, #tpu.memory_space<vmem>>, %arg3: memref<32x96xf32, #tpu.memory_space<vmem>>, %arg4: memref<1x32xf32, #tpu.memory_space<vmem>>, %arg5: memref<32x32xf32, #tpu.memory_space<vmem>>, %arg6: memref<1x32xf32, #tpu.memory_space<vmem>>, %arg7: memref<4x96xf32, #tpu.memory_space<vmem>>, %arg8: memref<1x96xf32, #tpu.memory_space<vmem>>, %arg9: memref<32x96xf32, #tpu.memory_space<vmem>>, %arg10: memref<1x32xf32, #tpu.memory_space<vmem>>, %arg11: memref<128x16xf32, #tpu.memory_space<vmem>>, %arg12: memref<1x16xf32, #tpu.memory_space<vmem>>, %arg13: memref<2x16xf32, #tpu.memory_space<vmem>>) attributes {dimension_semantics = [], scalar_prefetch = 0 : i64, scratch_operands = 0 : i64, tpu.core_type = #tpu.core_type<tc>} {
    %c0 = arith.constant 0 : index
    %c0_0 = arith.constant 0 : index
    %0 = vector.load %arg0[%c0, %c0_0] : memref<2x32xf32, #tpu.memory_space<vmem>>, vector<2x32xf32>
    %c0_1 = arith.constant 0 : index
    %c0_2 = arith.constant 0 : index
    %1 = vector.load %arg1[%c0_1, %c0_2] : memref<32x768xf32, #tpu.memory_space<vmem>>, vector<32x768xf32>
    %cst = arith.constant dense<0.000000e+00> : vector<2x768xf32>
    %2 = tpu.matmul %0, %1, %cst {dimension_numbers = #tpu.dot_dimension_numbers<[1], [0], [0], [1], [0, 0, 1, 1], [], []>} : vector<2x32xf32>, vector<32x768xf32>, vector<2x768xf32> -> vector<2x768xf32>
    %c0_3 = arith.constant 0 : index
    %c0_4 = arith.constant 0 : index
    %3 = vector.load %arg2[%c0_3, %c0_4] : memref<1x768xf32, #tpu.memory_space<vmem>>, vector<1x768xf32>
    %4 = vector.broadcast %3 : vector<1x768xf32> to vector<2x768xf32>
    %5 = arith.addf %2, %4 : vector<2x768xf32>
    %c0_5 = arith.constant 0 : index
    %c0_6 = arith.constant 0 : index
    %6 = vector.load %arg3[%c0_5, %c0_6] : memref<32x96xf32, #tpu.memory_space<vmem>>, vector<32x96xf32>
    %c0_7 = arith.constant 0 : index
    %c0_8 = arith.constant 0 : index
    %7 = vector.load %arg4[%c0_7, %c0_8] : memref<1x32xf32, #tpu.memory_space<vmem>>, vector<1x32xf32>
    %8 = vector.shape_cast %7 : vector<1x32xf32> to vector<1x32xf32>
    %9 = vector.broadcast %8 : vector<1x32xf32> to vector<2x32xf32>
    %10 = vector.extract_strided_slice %5 {offsets = [0, 0], sizes = [2, 64], strides = [1, 1]} : vector<2x768xf32> to vector<2x64xf32>
    %11 = arith.negf %10 : vector<2x64xf32>
    %12 = math.exp %11 : vector<2x64xf32>
    %cst_9 = arith.constant 1.000000e+00 : f32
    %13 = vector.broadcast %cst_9 : f32 to vector<2x64xf32>
    %14 = arith.addf %13, %12 : vector<2x64xf32>
    %15 = arith.divf %13, %14 : vector<2x64xf32>
    %16 = vector.extract_strided_slice %15 {offsets = [0, 0], sizes = [2, 32], strides = [1, 1]} : vector<2x64xf32> to vector<2x32xf32>
    %17 = vector.extract_strided_slice %15 {offsets = [0, 32], sizes = [2, 32], strides = [1, 1]} : vector<2x64xf32> to vector<2x32xf32>
    %18 = vector.extract_strided_slice %5 {offsets = [0, 64], sizes = [2, 32], strides = [1, 1]} : vector<2x768xf32> to vector<2x32xf32>
    %19 = arith.mulf %16, %9 : vector<2x32xf32>
    %20 = arith.addf %18, %19 : vector<2x32xf32>
    %21 = math.tanh %20 : vector<2x32xf32>
    %cst_10 = arith.constant 1.000000e+00 : f32
    %22 = vector.broadcast %cst_10 : f32 to vector<2x32xf32>
    %23 = arith.subf %22, %17 : vector<2x32xf32>
    %24 = arith.mulf %23, %21 : vector<2x32xf32>
    %cst_11 = arith.constant dense<0.000000e+00> : vector<2x96xf32>
    %25 = tpu.matmul %24, %6, %cst_11 {dimension_numbers = #tpu.dot_dimension_numbers<[1], [0], [0], [1], [0, 0, 1, 1], [], []>} : vector<2x32xf32>, vector<32x96xf32>, vector<2x96xf32> -> vector<2x96xf32>
    %26 = vector.extract_strided_slice %5 {offsets = [0, 96], sizes = [2, 64], strides = [1, 1]} : vector<2x768xf32> to vector<2x64xf32>
    %27 = vector.extract_strided_slice %25 {offsets = [0, 0], sizes = [2, 64], strides = [1, 1]} : vector<2x96xf32> to vector<2x64xf32>
    %28 = arith.addf %26, %27 : vector<2x64xf32>
    %29 = arith.negf %28 : vector<2x64xf32>
    %30 = math.exp %29 : vector<2x64xf32>
    %cst_12 = arith.constant 1.000000e+00 : f32
    %31 = vector.broadcast %cst_12 : f32 to vector<2x64xf32>
    %32 = arith.addf %31, %30 : vector<2x64xf32>
    %33 = arith.divf %31, %32 : vector<2x64xf32>
    %34 = vector.extract_strided_slice %33 {offsets = [0, 0], sizes = [2, 32], strides = [1, 1]} : vector<2x64xf32> to vector<2x32xf32>
    %35 = vector.extract_strided_slice %33 {offsets = [0, 32], sizes = [2, 32], strides = [1, 1]} : vector<2x64xf32> to vector<2x32xf32>
    %36 = vector.extract_strided_slice %5 {offsets = [0, 160], sizes = [2, 32], strides = [1, 1]} : vector<2x768xf32> to vector<2x32xf32>
    %37 = vector.extract_strided_slice %25 {offsets = [0, 64], sizes = [2, 32], strides = [1, 1]} : vector<2x96xf32> to vector<2x32xf32>
    %38 = arith.addf %37, %9 : vector<2x32xf32>
    %39 = arith.mulf %34, %38 : vector<2x32xf32>
    %40 = arith.addf %36, %39 : vector<2x32xf32>
    %41 = math.tanh %40 : vector<2x32xf32>
    %cst_13 = arith.constant 1.000000e+00 : f32
    %42 = vector.broadcast %cst_13 : f32 to vector<2x32xf32>
    %43 = arith.subf %42, %35 : vector<2x32xf32>
    %44 = arith.mulf %43, %41 : vector<2x32xf32>
    %45 = arith.mulf %35, %24 : vector<2x32xf32>
    %46 = arith.addf %44, %45 : vector<2x32xf32>
    %cst_14 = arith.constant dense<0.000000e+00> : vector<2x96xf32>
    %47 = tpu.matmul %46, %6, %cst_14 {dimension_numbers = #tpu.dot_dimension_numbers<[1], [0], [0], [1], [0, 0, 1, 1], [], []>} : vector<2x32xf32>, vector<32x96xf32>, vector<2x96xf32> -> vector<2x96xf32>
    %48 = vector.extract_strided_slice %5 {offsets = [0, 192], sizes = [2, 64], strides = [1, 1]} : vector<2x768xf32> to vector<2x64xf32>
    %49 = vector.extract_strided_slice %47 {offsets = [0, 0], sizes = [2, 64], strides = [1, 1]} : vector<2x96xf32> to vector<2x64xf32>
    %50 = arith.addf %48, %49 : vector<2x64xf32>
    %51 = arith.negf %50 : vector<2x64xf32>
    %52 = math.exp %51 : vector<2x64xf32>
    %cst_15 = arith.constant 1.000000e+00 : f32
    %53 = vector.broadcast %cst_15 : f32 to vector<2x64xf32>
    %54 = arith.addf %53, %52 : vector<2x64xf32>
    %55 = arith.divf %53, %54 : vector<2x64xf32>
    %56 = vector.extract_strided_slice %55 {offsets = [0, 0], sizes = [2, 32], strides = [1, 1]} : vector<2x64xf32> to vector<2x32xf32>
    %57 = vector.extract_strided_slice %55 {offsets = [0, 32], sizes = [2, 32], strides = [1, 1]} : vector<2x64xf32> to vector<2x32xf32>
    %58 = vector.extract_strided_slice %5 {offsets = [0, 256], sizes = [2, 32], strides = [1, 1]} : vector<2x768xf32> to vector<2x32xf32>
    %59 = vector.extract_strided_slice %47 {offsets = [0, 64], sizes = [2, 32], strides = [1, 1]} : vector<2x96xf32> to vector<2x32xf32>
    %60 = arith.addf %59, %9 : vector<2x32xf32>
    %61 = arith.mulf %56, %60 : vector<2x32xf32>
    %62 = arith.addf %58, %61 : vector<2x32xf32>
    %63 = math.tanh %62 : vector<2x32xf32>
    %cst_16 = arith.constant 1.000000e+00 : f32
    %64 = vector.broadcast %cst_16 : f32 to vector<2x32xf32>
    %65 = arith.subf %64, %57 : vector<2x32xf32>
    %66 = arith.mulf %65, %63 : vector<2x32xf32>
    %67 = arith.mulf %57, %46 : vector<2x32xf32>
    %68 = arith.addf %66, %67 : vector<2x32xf32>
    %cst_17 = arith.constant dense<0.000000e+00> : vector<2x96xf32>
    %69 = tpu.matmul %68, %6, %cst_17 {dimension_numbers = #tpu.dot_dimension_numbers<[1], [0], [0], [1], [0, 0, 1, 1], [], []>} : vector<2x32xf32>, vector<32x96xf32>, vector<2x96xf32> -> vector<2x96xf32>
    %70 = vector.extract_strided_slice %5 {offsets = [0, 288], sizes = [2, 64], strides = [1, 1]} : vector<2x768xf32> to vector<2x64xf32>
    %71 = vector.extract_strided_slice %69 {offsets = [0, 0], sizes = [2, 64], strides = [1, 1]} : vector<2x96xf32> to vector<2x64xf32>
    %72 = arith.addf %70, %71 : vector<2x64xf32>
    %73 = arith.negf %72 : vector<2x64xf32>
    %74 = math.exp %73 : vector<2x64xf32>
    %cst_18 = arith.constant 1.000000e+00 : f32
    %75 = vector.broadcast %cst_18 : f32 to vector<2x64xf32>
    %76 = arith.addf %75, %74 : vector<2x64xf32>
    %77 = arith.divf %75, %76 : vector<2x64xf32>
    %78 = vector.extract_strided_slice %77 {offsets = [0, 0], sizes = [2, 32], strides = [1, 1]} : vector<2x64xf32> to vector<2x32xf32>
    %79 = vector.extract_strided_slice %77 {offsets = [0, 32], sizes = [2, 32], strides = [1, 1]} : vector<2x64xf32> to vector<2x32xf32>
    %80 = vector.extract_strided_slice %5 {offsets = [0, 352], sizes = [2, 32], strides = [1, 1]} : vector<2x768xf32> to vector<2x32xf32>
    %81 = vector.extract_strided_slice %69 {offsets = [0, 64], sizes = [2, 32], strides = [1, 1]} : vector<2x96xf32> to vector<2x32xf32>
    %82 = arith.addf %81, %9 : vector<2x32xf32>
    %83 = arith.mulf %78, %82 : vector<2x32xf32>
    %84 = arith.addf %80, %83 : vector<2x32xf32>
    %85 = math.tanh %84 : vector<2x32xf32>
    %cst_19 = arith.constant 1.000000e+00 : f32
    %86 = vector.broadcast %cst_19 : f32 to vector<2x32xf32>
    %87 = arith.subf %86, %79 : vector<2x32xf32>
    %88 = arith.mulf %87, %85 : vector<2x32xf32>
    %89 = arith.mulf %79, %68 : vector<2x32xf32>
    %90 = arith.addf %88, %89 : vector<2x32xf32>
    %cst_20 = arith.constant dense<0.000000e+00> : vector<2x96xf32>
    %91 = tpu.matmul %90, %6, %cst_20 {dimension_numbers = #tpu.dot_dimension_numbers<[1], [0], [0], [1], [0, 0, 1, 1], [], []>} : vector<2x32xf32>, vector<32x96xf32>, vector<2x96xf32> -> vector<2x96xf32>
    %92 = vector.extract_strided_slice %5 {offsets = [0, 384], sizes = [2, 64], strides = [1, 1]} : vector<2x768xf32> to vector<2x64xf32>
    %93 = vector.extract_strided_slice %91 {offsets = [0, 0], sizes = [2, 64], strides = [1, 1]} : vector<2x96xf32> to vector<2x64xf32>
    %94 = arith.addf %92, %93 : vector<2x64xf32>
    %95 = arith.negf %94 : vector<2x64xf32>
    %96 = math.exp %95 : vector<2x64xf32>
    %cst_21 = arith.constant 1.000000e+00 : f32
    %97 = vector.broadcast %cst_21 : f32 to vector<2x64xf32>
    %98 = arith.addf %97, %96 : vector<2x64xf32>
    %99 = arith.divf %97, %98 : vector<2x64xf32>
    %100 = vector.extract_strided_slice %99 {offsets = [0, 0], sizes = [2, 32], strides = [1, 1]} : vector<2x64xf32> to vector<2x32xf32>
    %101 = vector.extract_strided_slice %99 {offsets = [0, 32], sizes = [2, 32], strides = [1, 1]} : vector<2x64xf32> to vector<2x32xf32>
    %102 = vector.extract_strided_slice %5 {offsets = [0, 448], sizes = [2, 32], strides = [1, 1]} : vector<2x768xf32> to vector<2x32xf32>
    %103 = vector.extract_strided_slice %91 {offsets = [0, 64], sizes = [2, 32], strides = [1, 1]} : vector<2x96xf32> to vector<2x32xf32>
    %104 = arith.addf %103, %9 : vector<2x32xf32>
    %105 = arith.mulf %100, %104 : vector<2x32xf32>
    %106 = arith.addf %102, %105 : vector<2x32xf32>
    %107 = math.tanh %106 : vector<2x32xf32>
    %cst_22 = arith.constant 1.000000e+00 : f32
    %108 = vector.broadcast %cst_22 : f32 to vector<2x32xf32>
    %109 = arith.subf %108, %101 : vector<2x32xf32>
    %110 = arith.mulf %109, %107 : vector<2x32xf32>
    %111 = arith.mulf %101, %90 : vector<2x32xf32>
    %112 = arith.addf %110, %111 : vector<2x32xf32>
    %cst_23 = arith.constant dense<0.000000e+00> : vector<2x96xf32>
    %113 = tpu.matmul %112, %6, %cst_23 {dimension_numbers = #tpu.dot_dimension_numbers<[1], [0], [0], [1], [0, 0, 1, 1], [], []>} : vector<2x32xf32>, vector<32x96xf32>, vector<2x96xf32> -> vector<2x96xf32>
    %114 = vector.extract_strided_slice %5 {offsets = [0, 480], sizes = [2, 64], strides = [1, 1]} : vector<2x768xf32> to vector<2x64xf32>
    %115 = vector.extract_strided_slice %113 {offsets = [0, 0], sizes = [2, 64], strides = [1, 1]} : vector<2x96xf32> to vector<2x64xf32>
    %116 = arith.addf %114, %115 : vector<2x64xf32>
    %117 = arith.negf %116 : vector<2x64xf32>
    %118 = math.exp %117 : vector<2x64xf32>
    %cst_24 = arith.constant 1.000000e+00 : f32
    %119 = vector.broadcast %cst_24 : f32 to vector<2x64xf32>
    %120 = arith.addf %119, %118 : vector<2x64xf32>
    %121 = arith.divf %119, %120 : vector<2x64xf32>
    %122 = vector.extract_strided_slice %121 {offsets = [0, 0], sizes = [2, 32], strides = [1, 1]} : vector<2x64xf32> to vector<2x32xf32>
    %123 = vector.extract_strided_slice %121 {offsets = [0, 32], sizes = [2, 32], strides = [1, 1]} : vector<2x64xf32> to vector<2x32xf32>
    %124 = vector.extract_strided_slice %5 {offsets = [0, 544], sizes = [2, 32], strides = [1, 1]} : vector<2x768xf32> to vector<2x32xf32>
    %125 = vector.extract_strided_slice %113 {offsets = [0, 64], sizes = [2, 32], strides = [1, 1]} : vector<2x96xf32> to vector<2x32xf32>
    %126 = arith.addf %125, %9 : vector<2x32xf32>
    %127 = arith.mulf %122, %126 : vector<2x32xf32>
    %128 = arith.addf %124, %127 : vector<2x32xf32>
    %129 = math.tanh %128 : vector<2x32xf32>
    %cst_25 = arith.constant 1.000000e+00 : f32
    %130 = vector.broadcast %cst_25 : f32 to vector<2x32xf32>
    %131 = arith.subf %130, %123 : vector<2x32xf32>
    %132 = arith.mulf %131, %129 : vector<2x32xf32>
    %133 = arith.mulf %123, %112 : vector<2x32xf32>
    %134 = arith.addf %132, %133 : vector<2x32xf32>
    %cst_26 = arith.constant dense<0.000000e+00> : vector<2x96xf32>
    %135 = tpu.matmul %134, %6, %cst_26 {dimension_numbers = #tpu.dot_dimension_numbers<[1], [0], [0], [1], [0, 0, 1, 1], [], []>} : vector<2x32xf32>, vector<32x96xf32>, vector<2x96xf32> -> vector<2x96xf32>
    %136 = vector.extract_strided_slice %5 {offsets = [0, 576], sizes = [2, 64], strides = [1, 1]} : vector<2x768xf32> to vector<2x64xf32>
    %137 = vector.extract_strided_slice %135 {offsets = [0, 0], sizes = [2, 64], strides = [1, 1]} : vector<2x96xf32> to vector<2x64xf32>
    %138 = arith.addf %136, %137 : vector<2x64xf32>
    %139 = arith.negf %138 : vector<2x64xf32>
    %140 = math.exp %139 : vector<2x64xf32>
    %cst_27 = arith.constant 1.000000e+00 : f32
    %141 = vector.broadcast %cst_27 : f32 to vector<2x64xf32>
    %142 = arith.addf %141, %140 : vector<2x64xf32>
    %143 = arith.divf %141, %142 : vector<2x64xf32>
    %144 = vector.extract_strided_slice %143 {offsets = [0, 0], sizes = [2, 32], strides = [1, 1]} : vector<2x64xf32> to vector<2x32xf32>
    %145 = vector.extract_strided_slice %143 {offsets = [0, 32], sizes = [2, 32], strides = [1, 1]} : vector<2x64xf32> to vector<2x32xf32>
    %146 = vector.extract_strided_slice %5 {offsets = [0, 640], sizes = [2, 32], strides = [1, 1]} : vector<2x768xf32> to vector<2x32xf32>
    %147 = vector.extract_strided_slice %135 {offsets = [0, 64], sizes = [2, 32], strides = [1, 1]} : vector<2x96xf32> to vector<2x32xf32>
    %148 = arith.addf %147, %9 : vector<2x32xf32>
    %149 = arith.mulf %144, %148 : vector<2x32xf32>
    %150 = arith.addf %146, %149 : vector<2x32xf32>
    %151 = math.tanh %150 : vector<2x32xf32>
    %cst_28 = arith.constant 1.000000e+00 : f32
    %152 = vector.broadcast %cst_28 : f32 to vector<2x32xf32>
    %153 = arith.subf %152, %145 : vector<2x32xf32>
    %154 = arith.mulf %153, %151 : vector<2x32xf32>
    %155 = arith.mulf %145, %134 : vector<2x32xf32>
    %156 = arith.addf %154, %155 : vector<2x32xf32>
    %cst_29 = arith.constant dense<0.000000e+00> : vector<2x96xf32>
    %157 = tpu.matmul %156, %6, %cst_29 {dimension_numbers = #tpu.dot_dimension_numbers<[1], [0], [0], [1], [0, 0, 1, 1], [], []>} : vector<2x32xf32>, vector<32x96xf32>, vector<2x96xf32> -> vector<2x96xf32>
    %158 = vector.extract_strided_slice %5 {offsets = [0, 672], sizes = [2, 64], strides = [1, 1]} : vector<2x768xf32> to vector<2x64xf32>
    %159 = vector.extract_strided_slice %157 {offsets = [0, 0], sizes = [2, 64], strides = [1, 1]} : vector<2x96xf32> to vector<2x64xf32>
    %160 = arith.addf %158, %159 : vector<2x64xf32>
    %161 = arith.negf %160 : vector<2x64xf32>
    %162 = math.exp %161 : vector<2x64xf32>
    %cst_30 = arith.constant 1.000000e+00 : f32
    %163 = vector.broadcast %cst_30 : f32 to vector<2x64xf32>
    %164 = arith.addf %163, %162 : vector<2x64xf32>
    %165 = arith.divf %163, %164 : vector<2x64xf32>
    %166 = vector.extract_strided_slice %165 {offsets = [0, 0], sizes = [2, 32], strides = [1, 1]} : vector<2x64xf32> to vector<2x32xf32>
    %167 = vector.extract_strided_slice %165 {offsets = [0, 32], sizes = [2, 32], strides = [1, 1]} : vector<2x64xf32> to vector<2x32xf32>
    %168 = vector.extract_strided_slice %5 {offsets = [0, 736], sizes = [2, 32], strides = [1, 1]} : vector<2x768xf32> to vector<2x32xf32>
    %169 = vector.extract_strided_slice %157 {offsets = [0, 64], sizes = [2, 32], strides = [1, 1]} : vector<2x96xf32> to vector<2x32xf32>
    %170 = arith.addf %169, %9 : vector<2x32xf32>
    %171 = arith.mulf %166, %170 : vector<2x32xf32>
    %172 = arith.addf %168, %171 : vector<2x32xf32>
    %173 = math.tanh %172 : vector<2x32xf32>
    %cst_31 = arith.constant 1.000000e+00 : f32
    %174 = vector.broadcast %cst_31 : f32 to vector<2x32xf32>
    %175 = arith.subf %174, %167 : vector<2x32xf32>
    %176 = arith.mulf %175, %173 : vector<2x32xf32>
    %177 = arith.mulf %167, %156 : vector<2x32xf32>
    %178 = arith.addf %176, %177 : vector<2x32xf32>
    %c0_32 = arith.constant 0 : index
    %c0_33 = arith.constant 0 : index
    %179 = vector.load %arg5[%c0_32, %c0_33] : memref<32x32xf32, #tpu.memory_space<vmem>>, vector<32x32xf32>
    %cst_34 = arith.constant dense<0.000000e+00> : vector<2x32xf32>
    %180 = tpu.matmul %178, %179, %cst_34 {dimension_numbers = #tpu.dot_dimension_numbers<[1], [0], [0], [1], [0, 0, 1, 1], [], []>} : vector<2x32xf32>, vector<32x32xf32>, vector<2x32xf32> -> vector<2x32xf32>
    %c0_35 = arith.constant 0 : index
    %c0_36 = arith.constant 0 : index
    %181 = vector.load %arg6[%c0_35, %c0_36] : memref<1x32xf32, #tpu.memory_space<vmem>>, vector<1x32xf32>
    %182 = vector.broadcast %181 : vector<1x32xf32> to vector<2x32xf32>
    %183 = arith.addf %180, %182 : vector<2x32xf32>
    %c0_37 = arith.constant 0 : index
    %c0_38 = arith.constant 0 : index
    %184 = vector.load %arg9[%c0_37, %c0_38] : memref<32x96xf32, #tpu.memory_space<vmem>>, vector<32x96xf32>
    %c0_39 = arith.constant 0 : index
    %c0_40 = arith.constant 0 : index
    %185 = vector.load %arg10[%c0_39, %c0_40] : memref<1x32xf32, #tpu.memory_space<vmem>>, vector<1x32xf32>
    %186 = vector.shape_cast %185 : vector<1x32xf32> to vector<1x32xf32>
    %187 = vector.broadcast %186 : vector<1x32xf32> to vector<2x32xf32>
    %c0_41 = arith.constant 0 : index
    %c0_42 = arith.constant 0 : index
    %188 = vector.load %arg8[%c0_41, %c0_42] : memref<1x96xf32, #tpu.memory_space<vmem>>, vector<1x96xf32>
    %189 = vector.extract_strided_slice %0 {offsets = [0, 28], sizes = [2, 4], strides = [1, 1]} : vector<2x32xf32> to vector<2x4xf32>
    %c0_43 = arith.constant 0 : index
    %c0_44 = arith.constant 0 : index
    %190 = vector.load %arg7[%c0_43, %c0_44] : memref<4x96xf32, #tpu.memory_space<vmem>>, vector<4x96xf32>
    %cst_45 = arith.constant dense<0.000000e+00> : vector<2x96xf32>
    %191 = tpu.matmul %189, %190, %cst_45 {dimension_numbers = #tpu.dot_dimension_numbers<[1], [0], [0], [1], [0, 0, 1, 1], [], []>} : vector<2x4xf32>, vector<4x96xf32>, vector<2x96xf32> -> vector<2x96xf32>
    %192 = vector.broadcast %188 : vector<1x96xf32> to vector<2x96xf32>
    %193 = arith.addf %191, %192 : vector<2x96xf32>
    %194 = vector.extract_strided_slice %188 {offsets = [0, 0], sizes = [1, 64], strides = [1, 1]} : vector<1x96xf32> to vector<1x64xf32>
    %195 = vector.shape_cast %194 : vector<1x64xf32> to vector<1x64xf32>
    %196 = vector.broadcast %195 : vector<1x64xf32> to vector<2x64xf32>
    %197 = vector.extract_strided_slice %188 {offsets = [0, 64], sizes = [1, 32], strides = [1, 1]} : vector<1x96xf32> to vector<1x32xf32>
    %198 = vector.shape_cast %197 : vector<1x32xf32> to vector<1x32xf32>
    %199 = vector.broadcast %198 : vector<1x32xf32> to vector<2x32xf32>
    %200 = vector.extract_strided_slice %193 {offsets = [0, 0], sizes = [2, 64], strides = [1, 1]} : vector<2x96xf32> to vector<2x64xf32>
    %201 = vector.extract_strided_slice %193 {offsets = [0, 64], sizes = [2, 32], strides = [1, 1]} : vector<2x96xf32> to vector<2x32xf32>
    %cst_46 = arith.constant dense<0.000000e+00> : vector<2x96xf32>
    %202 = tpu.matmul %183, %184, %cst_46 {dimension_numbers = #tpu.dot_dimension_numbers<[1], [0], [0], [1], [0, 0, 1, 1], [], []>} : vector<2x32xf32>, vector<32x96xf32>, vector<2x96xf32> -> vector<2x96xf32>
    %203 = vector.extract_strided_slice %202 {offsets = [0, 0], sizes = [2, 64], strides = [1, 1]} : vector<2x96xf32> to vector<2x64xf32>
    %204 = arith.addf %200, %203 : vector<2x64xf32>
    %205 = arith.negf %204 : vector<2x64xf32>
    %206 = math.exp %205 : vector<2x64xf32>
    %cst_47 = arith.constant 1.000000e+00 : f32
    %207 = vector.broadcast %cst_47 : f32 to vector<2x64xf32>
    %208 = arith.addf %207, %206 : vector<2x64xf32>
    %209 = arith.divf %207, %208 : vector<2x64xf32>
    %210 = vector.extract_strided_slice %209 {offsets = [0, 0], sizes = [2, 32], strides = [1, 1]} : vector<2x64xf32> to vector<2x32xf32>
    %211 = vector.extract_strided_slice %209 {offsets = [0, 32], sizes = [2, 32], strides = [1, 1]} : vector<2x64xf32> to vector<2x32xf32>
    %212 = vector.extract_strided_slice %202 {offsets = [0, 64], sizes = [2, 32], strides = [1, 1]} : vector<2x96xf32> to vector<2x32xf32>
    %213 = arith.addf %212, %187 : vector<2x32xf32>
    %214 = arith.mulf %210, %213 : vector<2x32xf32>
    %215 = arith.addf %201, %214 : vector<2x32xf32>
    %216 = math.tanh %215 : vector<2x32xf32>
    %cst_48 = arith.constant 1.000000e+00 : f32
    %217 = vector.broadcast %cst_48 : f32 to vector<2x32xf32>
    %218 = arith.subf %217, %211 : vector<2x32xf32>
    %219 = arith.mulf %218, %216 : vector<2x32xf32>
    %220 = arith.mulf %211, %183 : vector<2x32xf32>
    %221 = arith.addf %219, %220 : vector<2x32xf32>
    %cst_49 = arith.constant dense<0.000000e+00> : vector<2x96xf32>
    %222 = tpu.matmul %221, %184, %cst_49 {dimension_numbers = #tpu.dot_dimension_numbers<[1], [0], [0], [1], [0, 0, 1, 1], [], []>} : vector<2x32xf32>, vector<32x96xf32>, vector<2x96xf32> -> vector<2x96xf32>
    %223 = vector.extract_strided_slice %222 {offsets = [0, 0], sizes = [2, 64], strides = [1, 1]} : vector<2x96xf32> to vector<2x64xf32>
    %224 = arith.addf %196, %223 : vector<2x64xf32>
    %225 = arith.negf %224 : vector<2x64xf32>
    %226 = math.exp %225 : vector<2x64xf32>
    %cst_50 = arith.constant 1.000000e+00 : f32
    %227 = vector.broadcast %cst_50 : f32 to vector<2x64xf32>
    %228 = arith.addf %227, %226 : vector<2x64xf32>
    %229 = arith.divf %227, %228 : vector<2x64xf32>
    %230 = vector.extract_strided_slice %229 {offsets = [0, 0], sizes = [2, 32], strides = [1, 1]} : vector<2x64xf32> to vector<2x32xf32>
    %231 = vector.extract_strided_slice %229 {offsets = [0, 32], sizes = [2, 32], strides = [1, 1]} : vector<2x64xf32> to vector<2x32xf32>
    %232 = vector.extract_strided_slice %222 {offsets = [0, 64], sizes = [2, 32], strides = [1, 1]} : vector<2x96xf32> to vector<2x32xf32>
    %233 = arith.addf %232, %187 : vector<2x32xf32>
    %234 = arith.mulf %230, %233 : vector<2x32xf32>
    %235 = arith.addf %199, %234 : vector<2x32xf32>
    %236 = math.tanh %235 : vector<2x32xf32>
    %cst_51 = arith.constant 1.000000e+00 : f32
    %237 = vector.broadcast %cst_51 : f32 to vector<2x32xf32>
    %238 = arith.subf %237, %231 : vector<2x32xf32>
    %239 = arith.mulf %238, %236 : vector<2x32xf32>
    %240 = arith.mulf %231, %221 : vector<2x32xf32>
    %241 = arith.addf %239, %240 : vector<2x32xf32>
    %cst_52 = arith.constant dense<0.000000e+00> : vector<2x96xf32>
    %242 = tpu.matmul %241, %184, %cst_52 {dimension_numbers = #tpu.dot_dimension_numbers<[1], [0], [0], [1], [0, 0, 1, 1], [], []>} : vector<2x32xf32>, vector<32x96xf32>, vector<2x96xf32> -> vector<2x96xf32>
    %243 = vector.extract_strided_slice %242 {offsets = [0, 0], sizes = [2, 64], strides = [1, 1]} : vector<2x96xf32> to vector<2x64xf32>
    %244 = arith.addf %196, %243 : vector<2x64xf32>
    %245 = arith.negf %244 : vector<2x64xf32>
    %246 = math.exp %245 : vector<2x64xf32>
    %cst_53 = arith.constant 1.000000e+00 : f32
    %247 = vector.broadcast %cst_53 : f32 to vector<2x64xf32>
    %248 = arith.addf %247, %246 : vector<2x64xf32>
    %249 = arith.divf %247, %248 : vector<2x64xf32>
    %250 = vector.extract_strided_slice %249 {offsets = [0, 0], sizes = [2, 32], strides = [1, 1]} : vector<2x64xf32> to vector<2x32xf32>
    %251 = vector.extract_strided_slice %249 {offsets = [0, 32], sizes = [2, 32], strides = [1, 1]} : vector<2x64xf32> to vector<2x32xf32>
    %252 = vector.extract_strided_slice %242 {offsets = [0, 64], sizes = [2, 32], strides = [1, 1]} : vector<2x96xf32> to vector<2x32xf32>
    %253 = arith.addf %252, %187 : vector<2x32xf32>
    %254 = arith.mulf %250, %253 : vector<2x32xf32>
    %255 = arith.addf %199, %254 : vector<2x32xf32>
    %256 = math.tanh %255 : vector<2x32xf32>
    %cst_54 = arith.constant 1.000000e+00 : f32
    %257 = vector.broadcast %cst_54 : f32 to vector<2x32xf32>
    %258 = arith.subf %257, %251 : vector<2x32xf32>
    %259 = arith.mulf %258, %256 : vector<2x32xf32>
    %260 = arith.mulf %251, %241 : vector<2x32xf32>
    %261 = arith.addf %259, %260 : vector<2x32xf32>
    %cst_55 = arith.constant dense<0.000000e+00> : vector<2x96xf32>
    %262 = tpu.matmul %261, %184, %cst_55 {dimension_numbers = #tpu.dot_dimension_numbers<[1], [0], [0], [1], [0, 0, 1, 1], [], []>} : vector<2x32xf32>, vector<32x96xf32>, vector<2x96xf32> -> vector<2x96xf32>
    %263 = vector.extract_strided_slice %262 {offsets = [0, 0], sizes = [2, 64], strides = [1, 1]} : vector<2x96xf32> to vector<2x64xf32>
    %264 = arith.addf %196, %263 : vector<2x64xf32>
    %265 = arith.negf %264 : vector<2x64xf32>
    %266 = math.exp %265 : vector<2x64xf32>
    %cst_56 = arith.constant 1.000000e+00 : f32
    %267 = vector.broadcast %cst_56 : f32 to vector<2x64xf32>
    %268 = arith.addf %267, %266 : vector<2x64xf32>
    %269 = arith.divf %267, %268 : vector<2x64xf32>
    %270 = vector.extract_strided_slice %269 {offsets = [0, 0], sizes = [2, 32], strides = [1, 1]} : vector<2x64xf32> to vector<2x32xf32>
    %271 = vector.extract_strided_slice %269 {offsets = [0, 32], sizes = [2, 32], strides = [1, 1]} : vector<2x64xf32> to vector<2x32xf32>
    %272 = vector.extract_strided_slice %262 {offsets = [0, 64], sizes = [2, 32], strides = [1, 1]} : vector<2x96xf32> to vector<2x32xf32>
    %273 = arith.addf %272, %187 : vector<2x32xf32>
    %274 = arith.mulf %270, %273 : vector<2x32xf32>
    %275 = arith.addf %199, %274 : vector<2x32xf32>
    %276 = math.tanh %275 : vector<2x32xf32>
    %cst_57 = arith.constant 1.000000e+00 : f32
    %277 = vector.broadcast %cst_57 : f32 to vector<2x32xf32>
    %278 = arith.subf %277, %271 : vector<2x32xf32>
    %279 = arith.mulf %278, %276 : vector<2x32xf32>
    %280 = arith.mulf %271, %261 : vector<2x32xf32>
    %281 = arith.addf %279, %280 : vector<2x32xf32>
    %282 = tpu.concatenate %221, %241, %261, %281 in 1 : vector<2x32xf32>, vector<2x32xf32>, vector<2x32xf32>, vector<2x32xf32> -> vector<2x128xf32>
    %c0_58 = arith.constant 0 : index
    %c0_59 = arith.constant 0 : index
    %283 = vector.load %arg11[%c0_58, %c0_59] : memref<128x16xf32, #tpu.memory_space<vmem>>, vector<128x16xf32>
    %cst_60 = arith.constant dense<0.000000e+00> : vector<2x16xf32>
    %284 = tpu.matmul %282, %283, %cst_60 {dimension_numbers = #tpu.dot_dimension_numbers<[1], [0], [0], [1], [0, 0, 1, 1], [], []>} : vector<2x128xf32>, vector<128x16xf32>, vector<2x16xf32> -> vector<2x16xf32>
    %c0_61 = arith.constant 0 : index
    %c0_62 = arith.constant 0 : index
    %285 = vector.load %arg12[%c0_61, %c0_62] : memref<1x16xf32, #tpu.memory_space<vmem>>, vector<1x16xf32>
    %286 = vector.broadcast %285 : vector<1x16xf32> to vector<2x16xf32>
    %287 = arith.addf %284, %286 : vector<2x16xf32>
    %c0_63 = arith.constant 0 : index
    %c0_64 = arith.constant 0 : index
    %288 = vector.load %arg13[%c0_63, %c0_64] : memref<2x16xf32, #tpu.memory_space<vmem>>, vector<2x16xf32>
    tpu.vector_store %arg13[%c0_63, %c0_64], %287 {strides = array<i32>} : memref<2x16xf32, #tpu.memory_space<vmem>>, vector<2x16xf32>,
    return
  }
}

</mosaic_0001>

<llo_original>
// kernel: seq2seq_forward.1
$region0: #{seq2seq_forward.1}
  #allocation0 [shape = 'u32[]', space=smem, size = 0x4, offset = 0x4, fixed_abs, tag = 'smem constant byte address 0x4 - core index']
  #allocation1 [shape = 'u32[144,128]{1,0:T(1,128)}', space=vmem, size = 0x12000, scoped, tag = 'internal scratch']
  %s0 = inlined_call_operand.vmem [shape: f32[2,32], index: 0, kind: input, shape index: {}]
  %s1 = inlined_call_operand.vmem [shape: f32[32,768], index: 1, kind: input, shape index: {}]
  %s2 = inlined_call_operand.vmem [shape: f32[1,768], index: 2, kind: input, shape index: {}]
  %s3 = inlined_call_operand.hbm [shape: f32[32,96], index: 3, kind: input, shape index: {}]
  %s4 = inlined_call_operand.vmem [shape: f32[1,32], index: 4, kind: input, shape index: {}]
  %s5 = inlined_call_operand.hbm [shape: f32[32,32], index: 5, kind: input, shape index: {}]
  %s6 = inlined_call_operand.hbm [shape: f32[1,32], index: 6, kind: input, shape index: {}]
  %s7 = inlined_call_operand.hbm [shape: f32[4,96], index: 7, kind: input, shape index: {}]
  %s8 = inlined_call_operand.hbm [shape: f32[1,96], index: 8, kind: input, shape index: {}]
  %s9 = inlined_call_operand.hbm [shape: f32[32,96], index: 9, kind: input, shape index: {}]
  %s10 = inlined_call_operand.hbm [shape: f32[1,32], index: 10, kind: input, shape index: {}]
  %s11 = inlined_call_operand.vmem [shape: f32[128,16], index: 11, kind: input, shape index: {}]
  %s12 = inlined_call_operand.hbm [shape: f32[1,16], index: 12, kind: input, shape index: {}]
  %s13 = inlined_call_operand.vmem [shape: f32[2,16], index: 13, kind: output, shape index: {}]
  %s14 = sld [smem:[#allocation0]]
  $region94: #{seq2seq_forward.1} parent=0
    _
  %s16 = ssub.s32 1, %s14
  %s17 = scalar_select 0, %s16, %s14
  $region1: #{seq2seq_forward.1} parent=0
    #allocation2 [shape = 'u8[16384]{0}', space=vmem, size = 0x4000, scoped, tag = 'input window, operand 3, single buffered']
    #allocation3 [shape = 's32[1]{0}', space=sflag, size = 0x4, scoped, tag = 'scoped memory for seq2seq_forward.1']
    #allocation4 [shape = 'u8[16384]{0}', space=vmem, size = 0x4000, scoped, tag = 'input window, operand 5, single buffered']
    #allocation5 [shape = 's32[1]{0}', space=sflag, size = 0x4, scoped, tag = 'scoped memory for seq2seq_forward.1']
    #allocation6 [shape = 'u8[512]{0}', space=vmem, size = 0x400, scoped, tag = 'input window, operand 6, single buffered']
    #allocation7 [shape = 'u8[2048]{0}', space=vmem, size = 0x800, scoped, tag = 'input window, operand 7, single buffered']
    #allocation8 [shape = 's32[1]{0}', space=sflag, size = 0x4, scoped, tag = 'scoped memory for seq2seq_forward.1']
    #allocation9 [shape = 'u8[512]{0}', space=vmem, size = 0x400, scoped, tag = 'input window, operand 8, single buffered']
    #allocation10 [shape = 'u8[16384]{0}', space=vmem, size = 0x4000, scoped, tag = 'input window, operand 9, single buffered']
    #allocation11 [shape = 's32[1]{0}', space=sflag, size = 0x4, scoped, tag = 'scoped memory for seq2seq_forward.1']
    #allocation12 [shape = 'u8[512]{0}', space=vmem, size = 0x400, scoped, tag = 'input window, operand 10, single buffered']
    #allocation13 [shape = 'u8[512]{0}', space=vmem, size = 0x400, scoped, tag = 'input window, operand 12, single buffered']
    #allocation14 [shape = 's32[1]{0}', space=sflag, size = 0x4, scoped, tag = 'scoped memory for seq2seq_forward.1']
    %18 = vsyncpa [#allocation3], 0
    %19 = vsyncpa [#allocation5], 0
    %20 = vsyncpa [#allocation8], 0
    %21 = vsyncpa [#allocation11], 0
    %22 = vsyncpa [#allocation14], 0
    // Predicated region
    $region2: #{seq2seq_forward.1} parent=1 // pred_check
      _
    $region3: #{seq2seq_forward.1} parent=1 // pred_check_branch
      %24 = sbr.rel (0) target = $region5
    $region4: #{seq2seq_forward.1} parent=1 // pred_region
      _
    $region5: #{seq2seq_forward.1} parent=1 // pred_fallthru
      _
    // Predicated region
    $region6: #{seq2seq_forward.1} parent=1 // pred_check
      _
    $region7: #{seq2seq_forward.1} parent=1 // pred_check_branch
      %26 = sbr.rel (0) target = $region9
    $region8: #{seq2seq_forward.1} parent=1 // pred_region
      _
    $region9: #{seq2seq_forward.1} parent=1 // pred_fallthru
      _
    // Predicated region
    $region10: #{seq2seq_forward.1} parent=1 // pred_check
      _
    $region11: #{seq2seq_forward.1} parent=1 // pred_check_branch
      %28 = sbr.rel (0) target = $region13
    $region12: #{seq2seq_forward.1} parent=1 // pred_region
      _
    $region13: #{seq2seq_forward.1} parent=1 // pred_fallthru
      _
    // Predicated region
    $region14: #{seq2seq_forward.1} parent=1 // pred_check
      _
    $region15: #{seq2seq_forward.1} parent=1 // pred_check_branch
      %30 = sbr.rel (0) target = $region17
    $region16: #{seq2seq_forward.1} parent=1 // pred_region
      %s32 = ssub.s32 512, 512
      %33 = vsyncadd [#allocation3], %s32
      %s34 = sshll.u32 [#allocation2], 4
      %s35 = int_to_ptr.vmem [resolvable:$true] %s34
      %40 = dma.hbm_to_vmem [thread:$0]  %s3, 512, %s35, [#allocation3], 128, 128, 8
    $region17: #{seq2seq_forward.1} parent=1 // pred_fallthru
      _
    // Predicated region
    $region18: #{seq2seq_forward.1} parent=1 // pred_check
      _
    $region19: #{seq2seq_forward.1} parent=1 // pred_check_branch
      %42 = sbr.rel (0) target = $region21
    $region20: #{seq2seq_forward.1} parent=1 // pred_region
      _
    $region21: #{seq2seq_forward.1} parent=1 // pred_fallthru
      _
    // Predicated region
    $region22: #{seq2seq_forward.1} parent=1 // pred_check
      _
    $region23: #{seq2seq_forward.1} parent=1 // pred_check_branch
      %44 = sbr.rel (0) target = $region25
    $region24: #{seq2seq_forward.1} parent=1 // pred_region
      %s46 = ssub.s32 512, 512
      %47 = vsyncadd [#allocation5], %s46
      %s48 = sshll.u32 [#allocation4], 4
      %s49 = int_to_ptr.vmem [resolvable:$true] %s48
      %54 = dma.hbm_to_vmem [thread:$0]  %s5, 512, %s49, [#allocation5], 128, 128, 8
    $region25: #{seq2seq_forward.1} parent=1 // pred_fallthru
      _
    // Predicated region
    $region26: #{seq2seq_forward.1} parent=1 // pred_check
      _
    $region27: #{seq2seq_forward.1} parent=1 // pred_check_branch
      %56 = sbr.rel (0) target = $region29
    $region28: #{seq2seq_forward.1} parent=1 // pred_region
      %s58 = ssub.s32 16, 16
      %59 = vsyncadd [#allocation5], %s58
      %s61 = sshll.u32 [#allocation6], 4
      %s62 = int_to_ptr.vmem [resolvable:$true] %s61
      %64 = dma.hbm_to_vmem [thread:$0]  %s6, 16, %s62, [#allocation5]
    $region29: #{seq2seq_forward.1} parent=1 // pred_fallthru
      _
    // Predicated region
    $region30: #{seq2seq_forward.1} parent=1 // pred_check
      _
    $region31: #{seq2seq_forward.1} parent=1 // pred_check_branch
      %66 = sbr.rel (0) target = $region33
    $region32: #{seq2seq_forward.1} parent=1 // pred_region
      %s68 = ssub.s32 64, 64
      %69 = vsyncadd [#allocation8], %s68
      %s71 = sshll.u32 [#allocation7], 4
      %s72 = int_to_ptr.vmem [resolvable:$true] %s71
      %74 = dma.hbm_to_vmem [thread:$0]  %s7, 64, %s72, [#allocation8]
    $region33: #{seq2seq_forward.1} parent=1 // pred_fallthru
      _
    // Predicated region
    $region34: #{seq2seq_forward.1} parent=1 // pred_check
      _
    $region35: #{seq2seq_forward.1} parent=1 // pred_check_branch
      %76 = sbr.rel (0) target = $region37
    $region36: #{seq2seq_forward.1} parent=1 // pred_region
      %s78 = ssub.s32 16, 16
      %79 = vsyncadd [#allocation8], %s78
      %s81 = sshll.u32 [#allocation9], 4
      %s82 = int_to_ptr.vmem [resolvable:$true] %s81
      %84 = dma.hbm_to_vmem [thread:$0]  %s8, 16, %s82, [#allocation8]
    $region37: #{seq2seq_forward.1} parent=1 // pred_fallthru
      _
    // Predicated region
    $region38: #{seq2seq_forward.1} parent=1 // pred_check
      _
    $region39: #{seq2seq_forward.1} parent=1 // pred_check_branch
      %86 = sbr.rel (0) target = $region41
    $region40: #{seq2seq_forward.1} parent=1 // pred_region
      %s88 = ssub.s32 512, 512
      %89 = vsyncadd [#allocation11], %s88
      %s90 = sshll.u32 [#allocation10], 4
      %s91 = int_to_ptr.vmem [resolvable:$true] %s90
      %96 = dma.hbm_to_vmem [thread:$0]  %s9, 512, %s91, [#allocation11], 128, 128, 8
    $region41: #{seq2seq_forward.1} parent=1 // pred_fallthru
      _
    // Predicated region
    $region42: #{seq2seq_forward.1} parent=1 // pred_check
      _
    $region43: #{seq2seq_forward.1} parent=1 // pred_check_branch
      %98 = sbr.rel (0) target = $region45
    $region44: #{seq2seq_forward.1} parent=1 // pred_region
      %s100 = ssub.s32 16, 16
      %101 = vsyncadd [#allocation11], %s100
      %s103 = sshll.u32 [#allocation12], 4
      %s104 = int_to_ptr.vmem [resolvable:$true] %s103
      %106 = dma.hbm_to_vmem [thread:$0]  %s10, 16, %s104, [#allocation11]
    $region45: #{seq2seq_forward.1} parent=1 // pred_fallthru
      _
    // Predicated region
    $region46: #{seq2seq_forward.1} parent=1 // pred_check
      _
    $region47: #{seq2seq_forward.1} parent=1 // pred_check_branch
      %108 = sbr.rel (0) target = $region49
    $region48: #{seq2seq_forward.1} parent=1 // pred_region
      _
    $region49: #{seq2seq_forward.1} parent=1 // pred_fallthru
      _
    // Predicated region
    $region50: #{seq2seq_forward.1} parent=1 // pred_check
      _
    $region51: #{seq2seq_forward.1} parent=1 // pred_check_branch
      %110 = sbr.rel (0) target = $region53
    $region52: #{seq2seq_forward.1} parent=1 // pred_region
      %s112 = ssub.s32 16, 16
      %113 = vsyncadd [#allocation14], %s112
      %s115 = sshll.u32 [#allocation13], 4
      %s116 = int_to_ptr.vmem [resolvable:$true] %s115
      %118 = dma.hbm_to_vmem [thread:$0]  %s12, 16, %s116, [#allocation14]
    $region53: #{seq2seq_forward.1} parent=1 // pred_fallthru
      _
    // Predicated region
    $region54: #{seq2seq_forward.1} parent=1 // pred_check
      _
    $region55: #{seq2seq_forward.1} parent=1 // pred_check_branch
      %120 = sbr.rel (0) target = $region57
    $region56: #{seq2seq_forward.1} parent=1 // pred_region
      %121 = dma.done [#allocation3], 512
    $region57: #{seq2seq_forward.1} parent=1 // pred_fallthru
      _
    // Predicated region
    $region58: #{seq2seq_forward.1} parent=1 // pred_check
      _
    $region59: #{seq2seq_forward.1} parent=1 // pred_check_branch
      %123 = sbr.rel (0) target = $region61
    $region60: #{seq2seq_forward.1} parent=1 // pred_region
      %124 = dma.done [#allocation5], 512
    $region61: #{seq2seq_forward.1} parent=1 // pred_fallthru
      _
    // Predicated region
    $region62: #{seq2seq_forward.1} parent=1 // pred_check
      _
    $region63: #{seq2seq_forward.1} parent=1 // pred_check_branch
      %126 = sbr.rel (0) target = $region65
    $region64: #{seq2seq_forward.1} parent=1 // pred_region
      %127 = dma.done [#allocation5], 16
    $region65: #{seq2seq_forward.1} parent=1 // pred_fallthru
      _
    // Predicated region
    $region66: #{seq2seq_forward.1} parent=1 // pred_check
      _
    $region67: #{seq2seq_forward.1} parent=1 // pred_check_branch
      %129 = sbr.rel (0) target = $region69
    $region68: #{seq2seq_forward.1} parent=1 // pred_region
      %130 = dma.done [#allocation8], 64
    $region69: #{seq2seq_forward.1} parent=1 // pred_fallthru
      _
    // Predicated region
    $region70: #{seq2seq_forward.1} parent=1 // pred_check
      _
    $region71: #{seq2seq_forward.1} parent=1 // pred_check_branch
      %132 = sbr.rel (0) target = $region73
    $region72: #{seq2seq_forward.1} parent=1 // pred_region
      %133 = dma.done [#allocation8], 16
    $region73: #{seq2seq_forward.1} parent=1 // pred_fallthru
      _
    // Predicated region
    $region74: #{seq2seq_forward.1} parent=1 // pred_check
      _
    $region75: #{seq2seq_forward.1} parent=1 // pred_check_branch
      %135 = sbr.rel (0) target = $region77
    $region76: #{seq2seq_forward.1} parent=1 // pred_region
      %136 = dma.done [#allocation11], 512
    $region77: #{seq2seq_forward.1} parent=1 // pred_fallthru
      _
    // Predicated region
    $region78: #{seq2seq_forward.1} parent=1 // pred_check
      _
    $region79: #{seq2seq_forward.1} parent=1 // pred_check_branch
      %138 = sbr.rel (0) target = $region81
    $region80: #{seq2seq_forward.1} parent=1 // pred_region
      %139 = dma.done [#allocation11], 16
    $region81: #{seq2seq_forward.1} parent=1 // pred_fallthru
      _
    // Predicated region
    $region82: #{seq2seq_forward.1} parent=1 // pred_check
      _
    $region83: #{seq2seq_forward.1} parent=1 // pred_check_branch
      %141 = sbr.rel (0) target = $region85
    $region84: #{seq2seq_forward.1} parent=1 // pred_region
      %142 = dma.done [#allocation14], 16
    $region85: #{seq2seq_forward.1} parent=1 // pred_fallthru
      _
    %v143 = vld [vmem:[%s0] sm:$0x3]
    %v144 = vld [vmem:[%s1] sm:$0xff]
    %v145 = vld [vmem:[%s1 + $0x8] sm:$0xff]
    %v146 = vld [vmem:[%s1 + $0x10] sm:$0xff]
    %v147 = vld [vmem:[%s1 + $0x18] sm:$0xff]
    %v148 = vld [vmem:[%s1 + $0x20] sm:$0xff]
    %v149 = vld [vmem:[%s1 + $0x28] sm:$0xff]
    %v150 = vld [vmem:[%s1 + $0x30] sm:$0xff]
    %v151 = vld [vmem:[%s1 + $0x38] sm:$0xff]
    %v152 = vld [vmem:[%s1 + $0x40] sm:$0xff]
    %v153 = vld [vmem:[%s1 + $0x48] sm:$0xff]
    %v154 = vld [vmem:[%s1 + $0x50] sm:$0xff]
    %v155 = vld [vmem:[%s1 + $0x58] sm:$0xff]
    %v156 = vld [vmem:[%s1 + $0x60] sm:$0xff]
    %v157 = vld [vmem:[%s1 + $0x68] sm:$0xff]
    %v158 = vld [vmem:[%s1 + $0x70] sm:$0xff]
    %v159 = vld [vmem:[%s1 + $0x78] sm:$0xff]
    %v160 = vld [vmem:[%s1 + $0x80] sm:$0xff]
    %v161 = vld [vmem:[%s1 + $0x88] sm:$0xff]
    %v162 = vld [vmem:[%s1 + $0x90] sm:$0xff]
    %v163 = vld [vmem:[%s1 + $0x98] sm:$0xff]
    %v164 = vld [vmem:[%s1 + $0xa0] sm:$0xff]
    %v165 = vld [vmem:[%s1 + $0xa8] sm:$0xff]
    %v166 = vld [vmem:[%s1 + $0xb0] sm:$0xff]
    %v167 = vld [vmem:[%s1 + $0xb8] sm:$0xff]
    %v168 = vld [vmem:[%s2] sm:$0x3f]
    %v170 = vlaneseq
    %v171 = vshrl.u32 %v170, 7
    %v172 = vsub.s32 0, %v171
    %v173 = vrot.slane %v168, %v172
    %v174 = vlaneseq
    %v175 = vshrl.u32 %v174, 7
    %v176 = vsub.s32 1, %v175
    %v177 = vrot.slane %v168, %v176
    %v178 = vlaneseq
    %v179 = vshrl.u32 %v178, 7
    %v180 = vsub.s32 2, %v179
    %v181 = vrot.slane %v168, %v180
    %v182 = vlaneseq
    %v183 = vshrl.u32 %v182, 7
    %v184 = vsub.s32 3, %v183
    %v185 = vrot.slane %v168, %v184
    %v186 = vlaneseq
    %v187 = vshrl.u32 %v186, 7
    %v188 = vsub.s32 4, %v187
    %v189 = vrot.slane %v168, %v188
    %v190 = vlaneseq
    %v191 = vshrl.u32 %v190, 7
    %v192 = vsub.s32 5, %v191
    %v193 = vrot.slane %v168, %v192
    %vm200 = vcmask 261120
    %v202 = vsel %vm200, %v143, 0
    %204 = vmatprep.subr.mxu0 %v145
    %205 = vmatpush1.msra.mxu0 %v144
    %206 = vmatprep.subr.mxu0 %v151
    %207 = vmatpush1.msra.mxu0 %v150
    %208 = vmatprep.subr.mxu0 %v157
    %209 = vmatpush1.msra.mxu0 %v156
    %210 = vmatprep.subr.mxu0 %v163
    %211 = vmatpush1.msra.mxu0 %v162
    %212 = vmatprep.subr.mxu0 0.0
    %213 = vmatpush1.msra.mxu0 0.0
    %214 = vmatprep.subr.mxu0 0.0
    %215 = vmatpush1.msra.mxu0 0.0
    %216 = vmatprep.subr.mxu0 0.0
    %217 = vmatpush1.msra.mxu0 0.0
    %218 = vmatprep.subr.mxu0 0.0
    %219 = vmatpush1.msra.mxu0 0.0
    %220 = vmatprep.subr.mxu0 0.0
    %221 = vmatpush1.msra.mxu0 0.0
    %222 = vmatprep.subr.mxu0 0.0
    %223 = vmatpush1.msra.mxu0 0.0
    %224 = vmatprep.subr.mxu0 0.0
    %225 = vmatpush1.msra.mxu0 0.0
    %226 = vmatprep.subr.mxu0 0.0
    %227 = vmatpush1.msra.mxu0 0.0
    %228 = vmatprep.subr.mxu0 0.0
    %229 = vmatpush1.msra.mxu0 0.0
    %230 = vmatprep.subr.mxu0 0.0
    %231 = vmatpush1.msra.mxu0 0.0
    %232 = vmatprep.subr.mxu0 0.0
    %233 = vmatpush1.msra.mxu0 0.0
    %234 = vmatprep.subr.mxu0 0.0
    %235 = vmatpush1.msra.mxu0 0.0
    %236 = vmatprep.subr.mxu0 0.0
    %237 = vmatpush1.msra.mxu0 0.0
    %238 = vmatprep.subr.mxu0 0.0
    %239 = vmatpush1.msra.mxu0 0.0
    %240 = vmatprep.subr.mxu0 0.0
    %241 = vmatpush1.msra.mxu0 0.0
    %242 = vmatprep.subr.mxu0 0.0
    %243 = vmatpush1.msra.mxu0 0.0
    %244 = vmatprep.subr.mxu0 0.0
    %245 = vmatpush1.msra.mxu0 0.0
    %246 = vmatprep.subr.mxu0 0.0
    %247 = vmatpush1.msra.mxu0 0.0
    %248 = vmatprep.subr.mxu0 0.0
    %249 = vmatpush1.msra.mxu0 0.0
    %250 = vmatprep.subr.mxu0 0.0
    %251 = vmatpush1.msra.mxu0 0.0
    %252 = vmatprep.subr.mxu0 0.0
    %253 = vmatpush1.msra.mxu0 0.0
    %254 = vmatprep.subr.mxu0 0.0
    %255 = vmatpush1.msra.mxu0 0.0
    %256 = vmatprep.subr.mxu0 0.0
    %257 = vmatpush1.msra.mxu0 0.0
    %258 = vmatprep.subr.mxu0 0.0
    %259 = vmatpush1.msra.mxu0 0.0
    %260 = vmatprep.subr.mxu0 0.0
    %261 = vmatpush1.msra.mxu0 0.0
    %262 = vmatprep.subr.mxu0 0.0
    %263 = vmatpush1.msra.mxu0 0.0
    %264 = vmatprep.subr.mxu0 0.0
    %265 = vmatpush1.msra.mxu0 0.0
    %266 = vmatprep.subr.mxu0 0.0
    %267 = vmatpush1.msra.mxu0 0.0
    %268 = vmatprep.mubr.f32.mxu0 0.0
    %269 = vmatmul.mubr.f32.gmra.mrb[0].mxu0 %v202
    %v270 = vpop.f32.mrb[0].mxu0
    %v271 = vadd.f32 %v173, %v270
    %v272 = vpop.f32.mrb[0].mxu0
    %v273 = vadd.f32 %v177, %v272
    %274 = vdwg.mxu0
    %275 = vmatprep.subr.mxu0 %v147
    %276 = vmatpush1.msra.mxu0 %v146
    %277 = vmatprep.subr.mxu0 %v153
    %278 = vmatpush1.msra.mxu0 %v152
    %279 = vmatprep.subr.mxu0 %v159
    %280 = vmatpush1.msra.mxu0 %v158
    %281 = vmatprep.subr.mxu0 %v165
    %282 = vmatpush1.msra.mxu0 %v164
    %283 = vmatprep.subr.mxu0 0.0
    %284 = vmatpush1.msra.mxu0 0.0
    %285 = vmatprep.subr.mxu0 0.0
    %286 = vmatpush1.msra.mxu0 0.0
    %287 = vmatprep.subr.mxu0 0.0
    %288 = vmatpush1.msra.mxu0 0.0
    %289 = vmatprep.subr.mxu0 0.0
    %290 = vmatpush1.msra.mxu0 0.0
    %291 = vmatprep.subr.mxu0 0.0
    %292 = vmatpush1.msra.mxu0 0.0
    %293 = vmatprep.subr.mxu0 0.0
    %294 = vmatpush1.msra.mxu0 0.0
    %295 = vmatprep.subr.mxu0 0.0
    %296 = vmatpush1.msra.mxu0 0.0
    %297 = vmatprep.subr.mxu0 0.0
    %298 = vmatpush1.msra.mxu0 0.0
    %299 = vmatprep.subr.mxu0 0.0
    %300 = vmatpush1.msra.mxu0 0.0
    %301 = vmatprep.subr.mxu0 0.0
    %302 = vmatpush1.msra.mxu0 0.0
    %303 = vmatprep.subr.mxu0 0.0
    %304 = vmatpush1.msra.mxu0 0.0
    %305 = vmatprep.subr.mxu0 0.0
    %306 = vmatpush1.msra.mxu0 0.0
    %307 = vmatprep.subr.mxu0 0.0
    %308 = vmatpush1.msra.mxu0 0.0
    %309 = vmatprep.subr.mxu0 0.0
    %310 = vmatpush1.msra.mxu0 0.0
    %311 = vmatprep.subr.mxu0 0.0
    %312 = vmatpush1.msra.mxu0 0.0
    %313 = vmatprep.subr.mxu0 0.0
    %314 = vmatpush1.msra.mxu0 0.0
    %315 = vmatprep.subr.mxu0 0.0
    %316 = vmatpush1.msra.mxu0 0.0
    %317 = vmatprep.subr.mxu0 0.0
    %318 = vmatpush1.msra.mxu0 0.0
    %319 = vmatprep.subr.mxu0 0.0
    %320 = vmatpush1.msra.mxu0 0.0
    %321 = vmatprep.subr.mxu0 0.0
    %322 = vmatpush1.msra.mxu0 0.0
    %323 = vmatprep.subr.mxu0 0.0
    %324 = vmatpush1.msra.mxu0 0.0
    %325 = vmatprep.subr.mxu0 0.0
    %326 = vmatpush1.msra.mxu0 0.0
    %327 = vmatprep.subr.mxu0 0.0
    %328 = vmatpush1.msra.mxu0 0.0
    %329 = vmatprep.subr.mxu0 0.0
    %330 = vmatpush1.msra.mxu0 0.0
    %331 = vmatprep.subr.mxu0 0.0
    %332 = vmatpush1.msra.mxu0 0.0
    %333 = vmatprep.subr.mxu0 0.0
    %334 = vmatpush1.msra.mxu0 0.0
    %335 = vmatprep.subr.mxu0 0.0
    %336 = vmatpush1.msra.mxu0 0.0
    %337 = vmatprep.subr.mxu0 0.0
    %338 = vmatpush1.msra.mxu0 0.0
    %339 = vmatprep.mubr.f32.mxu0 0.0
    %340 = vmatmul.mubr.f32.gmra.mrb[0].mxu0 %v202
    %v341 = vpop.f32.mrb[0].mxu0
    %v342 = vadd.f32 %v181, %v341
    %v343 = vpop.f32.mrb[0].mxu0
    %v344 = vadd.f32 %v185, %v343
    %345 = vdwg.mxu0
    %346 = vmatprep.subr.mxu0 %v149
    %347 = vmatpush1.msra.mxu0 %v148
    %348 = vmatprep.subr.mxu0 %v155
    %349 = vmatpush1.msra.mxu0 %v154
    %350 = vmatprep.subr.mxu0 %v161
    %351 = vmatpush1.msra.mxu0 %v160
    %352 = vmatprep.subr.mxu0 %v167
    %353 = vmatpush1.msra.mxu0 %v166
    %354 = vmatprep.subr.mxu0 0.0
    %355 = vmatpush1.msra.mxu0 0.0
    %356 = vmatprep.subr.mxu0 0.0
    %357 = vmatpush1.msra.mxu0 0.0
    %358 = vmatprep.subr.mxu0 0.0
    %359 = vmatpush1.msra.mxu0 0.0
    %360 = vmatprep.subr.mxu0 0.0
    %361 = vmatpush1.msra.mxu0 0.0
    %362 = vmatprep.subr.mxu0 0.0
    %363 = vmatpush1.msra.mxu0 0.0
    %364 = vmatprep.subr.mxu0 0.0
    %365 = vmatpush1.msra.mxu0 0.0
    %366 = vmatprep.subr.mxu0 0.0
    %367 = vmatpush1.msra.mxu0 0.0
    %368 = vmatprep.subr.mxu0 0.0
    %369 = vmatpush1.msra.mxu0 0.0
    %370 = vmatprep.subr.mxu0 0.0
    %371 = vmatpush1.msra.mxu0 0.0
    %372 = vmatprep.subr.mxu0 0.0
    %373 = vmatpush1.msra.mxu0 0.0
    %374 = vmatprep.subr.mxu0 0.0
    %375 = vmatpush1.msra.mxu0 0.0
    %376 = vmatprep.subr.mxu0 0.0
    %377 = vmatpush1.msra.mxu0 0.0
    %378 = vmatprep.subr.mxu0 0.0
    %379 = vmatpush1.msra.mxu0 0.0
    %380 = vmatprep.subr.mxu0 0.0
    %381 = vmatpush1.msra.mxu0 0.0
    %382 = vmatprep.subr.mxu0 0.0
    %383 = vmatpush1.msra.mxu0 0.0
    %384 = vmatprep.subr.mxu0 0.0
    %385 = vmatpush1.msra.mxu0 0.0
    %386 = vmatprep.subr.mxu0 0.0
    %387 = vmatpush1.msra.mxu0 0.0
    %388 = vmatprep.subr.mxu0 0.0
    %389 = vmatpush1.msra.mxu0 0.0
    %390 = vmatprep.subr.mxu0 0.0
    %391 = vmatpush1.msra.mxu0 0.0
    %392 = vmatprep.subr.mxu0 0.0
    %393 = vmatpush1.msra.mxu0 0.0
    %394 = vmatprep.subr.mxu0 0.0
    %395 = vmatpush1.msra.mxu0 0.0
    %396 = vmatprep.subr.mxu0 0.0
    %397 = vmatpush1.msra.mxu0 0.0
    %398 = vmatprep.subr.mxu0 0.0
    %399 = vmatpush1.msra.mxu0 0.0
    %400 = vmatprep.subr.mxu0 0.0
    %401 = vmatpush1.msra.mxu0 0.0
    %402 = vmatprep.subr.mxu0 0.0
    %403 = vmatpush1.msra.mxu0 0.0
    %404 = vmatprep.subr.mxu0 0.0
    %405 = vmatpush1.msra.mxu0 0.0
    %406 = vmatprep.subr.mxu0 0.0
    %407 = vmatpush1.msra.mxu0 0.0
    %408 = vmatprep.subr.mxu0 0.0
    %409 = vmatpush1.msra.mxu0 0.0
    %410 = vmatprep.mubr.f32.mxu0 0.0
    %411 = vmatmul.mubr.f32.gmra.mrb[0].mxu0 %v202
    %v412 = vpop.f32.mrb[0].mxu0
    %v413 = vadd.f32 %v189, %v412
    %v414 = vpop.f32.mrb[0].mxu0
    %v415 = vadd.f32 %v193, %v414
    %416 = vdwg.mxu0
    %v417 = vld [vmem:[#allocation2] sm:$0xff]
    %v418 = vld [vmem:[#allocation2 + $0x8] sm:$0xff]
    %v419 = vld [vmem:[#allocation2 + $0x10] sm:$0xff]
    %v420 = vld [vmem:[#allocation2 + $0x18] sm:$0xff]
    %v421 = vld [vmem:[%s4] sm:$0x1]
    %v423 = vlaneseq
    %v424 = vshrl.u32 %v423, 7
    %v425 = vsub.s32 0, %v424
    %v426 = vrot.slane %v421, %v425
    %v428 = vxor.u32 %v271, 2147483648
    %v429 = vmul.f32 %v428, 1.442695
    %v430 = vpow.pop %v429
    %v431 = vadd.f32 %v430, 1.0
    %v432 = vrcp.pop %v431
    %v433 = vmul.f32 1.0, %v432
    %v434 = vmul.f32 %v433, %v426
    %436 = vrot.lane.b32.xlu0 %v434, 64
    %v437 = vpop.permute.xlu0 %436
    %v439 = vadd.f32 %v271, %v437
    %v440 = vtanh.pop %v439
    %v441 = vsub.f32 1.0, %v433
    %443 = vrot.lane.b32.xlu0 %v440, 96
    %v444 = vpop.permute.xlu0 %443
    %v446 = vmul.f32 %v441, %v444
    %448 = vrot.lane.b32.xlu0 %v446, 96
    %v449 = vpop.permute.xlu0 %448
    %v450 = vsel %vm200, %v449, 0
    %452 = vmatprep.subr.mxu0 0.0
    %453 = vmatpush1.msra.mxu0 %v417
    %454 = vmatprep.subr.mxu0 0.0
    %455 = vmatpush1.msra.mxu0 %v418
    %456 = vmatprep.subr.mxu0 0.0
    %457 = vmatpush1.msra.mxu0 %v419
    %458 = vmatprep.subr.mxu0 0.0
    %459 = vmatpush1.msra.mxu0 %v420
    %460 = vmatprep.subr.mxu0 0.0
    %461 = vmatpush1.msra.mxu0 0.0
    %462 = vmatprep.subr.mxu0 0.0
    %463 = vmatpush1.msra.mxu0 0.0
    %464 = vmatprep.subr.mxu0 0.0
    %465 = vmatpush1.msra.mxu0 0.0
    %466 = vmatprep.subr.mxu0 0.0
    %467 = vmatpush1.msra.mxu0 0.0
    %468 = vmatprep.subr.mxu0 0.0
    %469 = vmatpush1.msra.mxu0 0.0
    %470 = vmatprep.subr.mxu0 0.0
    %471 = vmatpush1.msra.mxu0 0.0
    %472 = vmatprep.subr.mxu0 0.0
    %473 = vmatpush1.msra.mxu0 0.0
    %474 = vmatprep.subr.mxu0 0.0
    %475 = vmatpush1.msra.mxu0 0.0
    %476 = vmatprep.subr.mxu0 0.0
    %477 = vmatpush1.msra.mxu0 0.0
    %478 = vmatprep.subr.mxu0 0.0
    %479 = vmatpush1.msra.mxu0 0.0
    %480 = vmatprep.subr.mxu0 0.0
    %481 = vmatpush1.msra.mxu0 0.0
    %482 = vmatprep.subr.mxu0 0.0
    %483 = vmatpush1.msra.mxu0 0.0
    %484 = vmatprep.subr.mxu0 0.0
    %485 = vmatpush1.msra.mxu0 0.0
    %486 = vmatprep.subr.mxu0 0.0
    %487 = vmatpush1.msra.mxu0 0.0
    %488 = vmatprep.subr.mxu0 0.0
    %489 = vmatpush1.msra.mxu0 0.0
    %490 = vmatprep.subr.mxu0 0.0
    %491 = vmatpush1.msra.mxu0 0.0
    %492 = vmatprep.subr.mxu0 0.0
    %493 = vmatpush1.msra.mxu0 0.0
    %494 = vmatprep.subr.mxu0 0.0
    %495 = vmatpush1.msra.mxu0 0.0
    %496 = vmatprep.subr.mxu0 0.0
    %497 = vmatpush1.msra.mxu0 0.0
    %498 = vmatprep.subr.mxu0 0.0
    %499 = vmatpush1.msra.mxu0 0.0
    %500 = vmatprep.subr.mxu0 0.0
    %501 = vmatpush1.msra.mxu0 0.0
    %502 = vmatprep.subr.mxu0 0.0
    %503 = vmatpush1.msra.mxu0 0.0
    %504 = vmatprep.subr.mxu0 0.0
    %505 = vmatpush1.msra.mxu0 0.0
    %506 = vmatprep.subr.mxu0 0.0
    %507 = vmatpush1.msra.mxu0 0.0
    %508 = vmatprep.subr.mxu0 0.0
    %509 = vmatpush1.msra.mxu0 0.0
    %510 = vmatprep.subr.mxu0 0.0
    %511 = vmatpush1.msra.mxu0 0.0
    %512 = vmatprep.subr.mxu0 0.0
    %513 = vmatpush1.msra.mxu0 0.0
    %514 = vmatprep.subr.mxu0 0.0
    %515 = vmatpush1.msra.mxu0 0.0
    %516 = vmatprep.mubr.f32.mxu0 0.0
    %517 = vmatmul.mubr.f32.gmra.mrb[0].mxu0 %v450
    %v518 = vpop.f32.mrb[0].mxu0
    %v519 = vadd.f32 0.0, %v518
    %v520 = vpop.f32.mrb[0].mxu0
    %521 = vdwg.mxu0
    %523 = vrot.lane.b32.xlu0 %v519, 96
    %v524 = vpop.permute.xlu0 %523
    %v526 = vadd.f32 %v271, %v524
    %v527 = vadd.f32 %v273, %v524
    %v528 = vxor.u32 %v526, 2147483648
    %v529 = vxor.u32 %v527, 2147483648
    %v530 = vmul.f32 %v528, 1.442695
    %v531 = vpow.pop %v530
    %v532 = vmul.f32 %v529, 1.442695
    %v533 = vpow.pop %v532
    %v534 = vadd.f32 %v531, 1.0
    %v535 = vadd.f32 %v533, 1.0
    %v536 = vrcp.pop %v534
    %v537 = vmul.f32 1.0, %v536
    %v538 = vrcp.pop %v535
    %v539 = vmul.f32 1.0, %v538
    %540 = vrot.lane.b32.xlu0 %v426, 64
    %v541 = vpop.permute.xlu0 %540
    %v543 = vadd.f32 %v519, %v541
    %545 = vrot.lane.b32.xlu0 %v543, 32
    %v546 = vpop.permute.xlu0 %545
    %v548 = vmul.f32 %v537, %v546
    %550 = vrot.lane.b32.xlu0 %v548, 64
    %v551 = vpop.permute.xlu0 %550
    %v553 = vadd.f32 %v273, %v551
    %v554 = vtanh.pop %v553
    %v555 = vsub.f32 1.0, %v539
    %557 = vrot.lane.b32.xlu0 %v554, 96
    %v558 = vpop.permute.xlu0 %557
    %v560 = vmul.f32 %v555, %v558
    %v562 = vmul.f32 %v539, %v449
    %v563 = vadd.f32 %v560, %v562
    %v565 = vsel %vm200, %v563, 0
    %567 = vmatprep.subr.mxu0 0.0
    %568 = vmatpush1.msra.mxu0 %v417
    %569 = vmatprep.subr.mxu0 0.0
    %570 = vmatpush1.msra.mxu0 %v418
    %571 = vmatprep.subr.mxu0 0.0
    %572 = vmatpush1.msra.mxu0 %v419
    %573 = vmatprep.subr.mxu0 0.0
    %574 = vmatpush1.msra.mxu0 %v420
    %575 = vmatprep.subr.mxu0 0.0
    %576 = vmatpush1.msra.mxu0 0.0
    %577 = vmatprep.subr.mxu0 0.0
    %578 = vmatpush1.msra.mxu0 0.0
    %579 = vmatprep.subr.mxu0 0.0
    %580 = vmatpush1.msra.mxu0 0.0
    %581 = vmatprep.subr.mxu0 0.0
    %582 = vmatpush1.msra.mxu0 0.0
    %583 = vmatprep.subr.mxu0 0.0
    %584 = vmatpush1.msra.mxu0 0.0
    %585 = vmatprep.subr.mxu0 0.0
    %586 = vmatpush1.msra.mxu0 0.0
    %587 = vmatprep.subr.mxu0 0.0
    %588 = vmatpush1.msra.mxu0 0.0
    %589 = vmatprep.subr.mxu0 0.0
    %590 = vmatpush1.msra.mxu0 0.0
    %591 = vmatprep.subr.mxu0 0.0
    %592 = vmatpush1.msra.mxu0 0.0
    %593 = vmatprep.subr.mxu0 0.0
    %594 = vmatpush1.msra.mxu0 0.0
    %595 = vmatprep.subr.mxu0 0.0
    %596 = vmatpush1.msra.mxu0 0.0
    %597 = vmatprep.subr.mxu0 0.0
    %598 = vmatpush1.msra.mxu0 0.0
    %599 = vmatprep.subr.mxu0 0.0
    %600 = vmatpush1.msra.mxu0 0.0
    %601 = vmatprep.subr.mxu0 0.0
    %602 = vmatpush1.msra.mxu0 0.0
    %603 = vmatprep.subr.mxu0 0.0
    %604 = vmatpush1.msra.mxu0 0.0
    %605 = vmatprep.subr.mxu0 0.0
    %606 = vmatpush1.msra.mxu0 0.0
    %607 = vmatprep.subr.mxu0 0.0
    %608 = vmatpush1.msra.mxu0 0.0
    %609 = vmatprep.subr.mxu0 0.0
    %610 = vmatpush1.msra.mxu0 0.0
    %611 = vmatprep.subr.mxu0 0.0
    %612 = vmatpush1.msra.mxu0 0.0
    %613 = vmatprep.subr.mxu0 0.0
    %614 = vmatpush1.msra.mxu0 0.0
    %615 = vmatprep.subr.mxu0 0.0
    %616 = vmatpush1.msra.mxu0 0.0
    %617 = vmatprep.subr.mxu0 0.0
    %618 = vmatpush1.msra.mxu0 0.0
    %619 = vmatprep.subr.mxu0 0.0
    %620 = vmatpush1.msra.mxu0 0.0
    %621 = vmatprep.subr.mxu0 0.0
    %622 = vmatpush1.msra.mxu0 0.0
    %623 = vmatprep.subr.mxu0 0.0
    %624 = vmatpush1.msra.mxu0 0.0
    %625 = vmatprep.subr.mxu0 0.0
    %626 = vmatpush1.msra.mxu0 0.0
    %627 = vmatprep.subr.mxu0 0.0
    %628 = vmatpush1.msra.mxu0 0.0
    %629 = vmatprep.subr.mxu0 0.0
    %630 = vmatpush1.msra.mxu0 0.0
    %631 = vmatprep.mubr.f32.mxu0 0.0
    %632 = vmatmul.mubr.f32.gmra.mrb[0].mxu0 %v565
    %v633 = vpop.f32.mrb[0].mxu0
    %v634 = vadd.f32 0.0, %v633
    %v635 = vpop.f32.mrb[0].mxu0
    %636 = vdwg.mxu0
    %638 = vrot.lane.b32.xlu0 %v634, 64
    %v639 = vpop.permute.xlu0 %638
    %v641 = vadd.f32 %v273, %v639
    %v642 = vxor.u32 %v641, 2147483648
    %v643 = vmul.f32 %v642, 1.442695
    %v644 = vpow.pop %v643
    %v645 = vadd.f32 %v644, 1.0
    %v646 = vrcp.pop %v645
    %v647 = vmul.f32 1.0, %v646
    %v648 = vadd.f32 %v634, %v541
    %v649 = vmul.f32 %v647, %v648
    %651 = vrot.lane.b32.xlu0 %v649, 64
    %v652 = vpop.permute.xlu0 %651
    %v654 = vadd.f32 %v342, %v652
    %v655 = vtanh.pop %v654
    %v656 = vsub.f32 1.0, %v647
    %658 = vrot.lane.b32.xlu0 %v655, 96
    %v659 = vpop.permute.xlu0 %658
    %v661 = vmul.f32 %v656, %v659
    %662 = vrot.lane.b32.xlu0 %v563, 96
    %v663 = vpop.permute.xlu0 %662
    %v665 = vmul.f32 %v647, %v663
    %v666 = vadd.f32 %v661, %v665
    %668 = vrot.lane.b32.xlu0 %v666, 32
    %v669 = vpop.permute.xlu0 %668
    %v670 = vsel %vm200, %v669, 0
    %672 = vmatprep.subr.mxu0 0.0
    %673 = vmatpush1.msra.mxu0 %v417
    %674 = vmatprep.subr.mxu0 0.0
    %675 = vmatpush1.msra.mxu0 %v418
    %676 = vmatprep.subr.mxu0 0.0
    %677 = vmatpush1.msra.mxu0 %v419
    %678 = vmatprep.subr.mxu0 0.0
    %679 = vmatpush1.msra.mxu0 %v420
    %680 = vmatprep.subr.mxu0 0.0
    %681 = vmatpush1.msra.mxu0 0.0
    %682 = vmatprep.subr.mxu0 0.0
    %683 = vmatpush1.msra.mxu0 0.0
    %684 = vmatprep.subr.mxu0 0.0
    %685 = vmatpush1.msra.mxu0 0.0
    %686 = vmatprep.subr.mxu0 0.0
    %687 = vmatpush1.msra.mxu0 0.0
    %688 = vmatprep.subr.mxu0 0.0
    %689 = vmatpush1.msra.mxu0 0.0
    %690 = vmatprep.subr.mxu0 0.0
    %691 = vmatpush1.msra.mxu0 0.0
    %692 = vmatprep.subr.mxu0 0.0
    %693 = vmatpush1.msra.mxu0 0.0
    %694 = vmatprep.subr.mxu0 0.0
    %695 = vmatpush1.msra.mxu0 0.0
    %696 = vmatprep.subr.mxu0 0.0
    %697 = vmatpush1.msra.mxu0 0.0
    %698 = vmatprep.subr.mxu0 0.0
    %699 = vmatpush1.msra.mxu0 0.0
    %700 = vmatprep.subr.mxu0 0.0
    %701 = vmatpush1.msra.mxu0 0.0
    %702 = vmatprep.subr.mxu0 0.0
    %703 = vmatpush1.msra.mxu0 0.0
    %704 = vmatprep.subr.mxu0 0.0
    %705 = vmatpush1.msra.mxu0 0.0
    %706 = vmatprep.subr.mxu0 0.0
    %707 = vmatpush1.msra.mxu0 0.0
    %708 = vmatprep.subr.mxu0 0.0
    %709 = vmatpush1.msra.mxu0 0.0
    %710 = vmatprep.subr.mxu0 0.0
    %711 = vmatpush1.msra.mxu0 0.0
    %712 = vmatprep.subr.mxu0 0.0
    %713 = vmatpush1.msra.mxu0 0.0
    %714 = vmatprep.subr.mxu0 0.0
    %715 = vmatpush1.msra.mxu0 0.0
    %716 = vmatprep.subr.mxu0 0.0
    %717 = vmatpush1.msra.mxu0 0.0
    %718 = vmatprep.subr.mxu0 0.0
    %719 = vmatpush1.msra.mxu0 0.0
    %720 = vmatprep.subr.mxu0 0.0
    %721 = vmatpush1.msra.mxu0 0.0
    %722 = vmatprep.subr.mxu0 0.0
    %723 = vmatpush1.msra.mxu0 0.0
    %724 = vmatprep.subr.mxu0 0.0
    %725 = vmatpush1.msra.mxu0 0.0
    %726 = vmatprep.subr.mxu0 0.0
    %727 = vmatpush1.msra.mxu0 0.0
    %728 = vmatprep.subr.mxu0 0.0
    %729 = vmatpush1.msra.mxu0 0.0
    %730 = vmatprep.subr.mxu0 0.0
    %731 = vmatpush1.msra.mxu0 0.0
    %732 = vmatprep.subr.mxu0 0.0
    %733 = vmatpush1.msra.mxu0 0.0
    %734 = vmatprep.subr.mxu0 0.0
    %735 = vmatpush1.msra.mxu0 0.0
    %736 = vmatprep.mubr.f32.mxu0 0.0
    %737 = vmatmul.mubr.f32.gmra.mrb[0].mxu0 %v670
    %v738 = vpop.f32.mrb[0].mxu0
    %v739 = vadd.f32 0.0, %v738
    %v740 = vpop.f32.mrb[0].mxu0
    %741 = vdwg.mxu0
    %743 = vrot.lane.b32.xlu0 %v739, 32
    %v744 = vpop.permute.xlu0 %743
    %v746 = vadd.f32 %v342, %v744
    %v747 = vxor.u32 %v746, 2147483648
    %v748 = vmul.f32 %v747, 1.442695
    %v749 = vpow.pop %v748
    %v750 = vadd.f32 %v749, 1.0
    %v751 = vrcp.pop %v750
    %v752 = vmul.f32 1.0, %v751
    %v753 = vadd.f32 %v739, %v541
    %755 = vrot.lane.b32.xlu0 %v753, 96
    %v756 = vpop.permute.xlu0 %755
    %v758 = vmul.f32 %v752, %v756
    %760 = vrot.lane.b32.xlu0 %v758, 64
    %v761 = vpop.permute.xlu0 %760
    %v763 = vadd.f32 %v342, %v761
    %v764 = vtanh.pop %v763
    %v765 = vsub.f32 1.0, %v752
    %767 = vrot.lane.b32.xlu0 %v764, 96
    %v768 = vpop.permute.xlu0 %767
    %v770 = vmul.f32 %v765, %v768
    %771 = vrot.lane.b32.xlu0 %v666, 96
    %v772 = vpop.permute.xlu0 %771
    %v774 = vmul.f32 %v752, %v772
    %v775 = vadd.f32 %v770, %v774
    %777 = vrot.lane.b32.xlu0 %v775, 64
    %v778 = vpop.permute.xlu0 %777
    %v779 = vsel %vm200, %v778, 0
    %781 = vmatprep.subr.mxu0 0.0
    %782 = vmatpush1.msra.mxu0 %v417
    %783 = vmatprep.subr.mxu0 0.0
    %784 = vmatpush1.msra.mxu0 %v418
    %785 = vmatprep.subr.mxu0 0.0
    %786 = vmatpush1.msra.mxu0 %v419
    %787 = vmatprep.subr.mxu0 0.0
    %788 = vmatpush1.msra.mxu0 %v420
    %789 = vmatprep.subr.mxu0 0.0
    %790 = vmatpush1.msra.mxu0 0.0
    %791 = vmatprep.subr.mxu0 0.0
    %792 = vmatpush1.msra.mxu0 0.0
    %793 = vmatprep.subr.mxu0 0.0
    %794 = vmatpush1.msra.mxu0 0.0
    %795 = vmatprep.subr.mxu0 0.0
    %796 = vmatpush1.msra.mxu0 0.0
    %797 = vmatprep.subr.mxu0 0.0
    %798 = vmatpush1.msra.mxu0 0.0
    %799 = vmatprep.subr.mxu0 0.0
    %800 = vmatpush1.msra.mxu0 0.0
    %801 = vmatprep.subr.mxu0 0.0
    %802 = vmatpush1.msra.mxu0 0.0
    %803 = vmatprep.subr.mxu0 0.0
    %804 = vmatpush1.msra.mxu0 0.0
    %805 = vmatprep.subr.mxu0 0.0
    %806 = vmatpush1.msra.mxu0 0.0
    %807 = vmatprep.subr.mxu0 0.0
    %808 = vmatpush1.msra.mxu0 0.0
    %809 = vmatprep.subr.mxu0 0.0
    %810 = vmatpush1.msra.mxu0 0.0
    %811 = vmatprep.subr.mxu0 0.0
    %812 = vmatpush1.msra.mxu0 0.0
    %813 = vmatprep.subr.mxu0 0.0
    %814 = vmatpush1.msra.mxu0 0.0
    %815 = vmatprep.subr.mxu0 0.0
    %816 = vmatpush1.msra.mxu0 0.0
    %817 = vmatprep.subr.mxu0 0.0
    %818 = vmatpush1.msra.mxu0 0.0
    %819 = vmatprep.subr.mxu0 0.0
    %820 = vmatpush1.msra.mxu0 0.0
    %821 = vmatprep.subr.mxu0 0.0
    %822 = vmatpush1.msra.mxu0 0.0
    %823 = vmatprep.subr.mxu0 0.0
    %824 = vmatpush1.msra.mxu0 0.0
    %825 = vmatprep.subr.mxu0 0.0
    %826 = vmatpush1.msra.mxu0 0.0
    %827 = vmatprep.subr.mxu0 0.0
    %828 = vmatpush1.msra.mxu0 0.0
    %829 = vmatprep.subr.mxu0 0.0
    %830 = vmatpush1.msra.mxu0 0.0
    %831 = vmatprep.subr.mxu0 0.0
    %832 = vmatpush1.msra.mxu0 0.0
    %833 = vmatprep.subr.mxu0 0.0
    %834 = vmatpush1.msra.mxu0 0.0
    %835 = vmatprep.subr.mxu0 0.0
    %836 = vmatpush1.msra.mxu0 0.0
    %837 = vmatprep.subr.mxu0 0.0
    %838 = vmatpush1.msra.mxu0 0.0
    %839 = vmatprep.subr.mxu0 0.0
    %840 = vmatpush1.msra.mxu0 0.0
    %841 = vmatprep.subr.mxu0 0.0
    %842 = vmatpush1.msra.mxu0 0.0
    %843 = vmatprep.subr.mxu0 0.0
    %844 = vmatpush1.msra.mxu0 0.0
    %845 = vmatprep.mubr.f32.mxu0 0.0
    %846 = vmatmul.mubr.f32.gmra.mrb[0].mxu0 %v779
    %v847 = vpop.f32.mrb[0].mxu0
    %v848 = vadd.f32 0.0, %v847
    %v849 = vpop.f32.mrb[0].mxu0
    %850 = vdwg.mxu0
    %v851 = vadd.f32 %v344, %v848
    %v852 = vxor.u32 %v851, 2147483648
    %v853 = vmul.f32 %v852, 1.442695
    %v854 = vpow.pop %v853
    %v855 = vadd.f32 %v854, 1.0
    %v856 = vrcp.pop %v855
    %v857 = vmul.f32 1.0, %v856
    %v858 = vadd.f32 %v848, %v541
    %860 = vrot.lane.b32.xlu0 %v858, 64
    %v861 = vpop.permute.xlu0 %860
    %v863 = vmul.f32 %v857, %v861
    %865 = vrot.lane.b32.xlu0 %v863, 64
    %v866 = vpop.permute.xlu0 %865
    %v868 = vadd.f32 %v344, %v866
    %v869 = vtanh.pop %v868
    %v870 = vsub.f32 1.0, %v857
    %872 = vrot.lane.b32.xlu0 %v869, 96
    %v873 = vpop.permute.xlu0 %872
    %v875 = vmul.f32 %v870, %v873
    %876 = vrot.lane.b32.xlu0 %v775, 96
    %v877 = vpop.permute.xlu0 %876
    %v879 = vmul.f32 %v857, %v877
    %v880 = vadd.f32 %v875, %v879
    %882 = vrot.lane.b32.xlu0 %v880, 96
    %v883 = vpop.permute.xlu0 %882
    %v884 = vsel %vm200, %v883, 0
    %886 = vmatprep.subr.mxu0 0.0
    %887 = vmatpush1.msra.mxu0 %v417
    %888 = vmatprep.subr.mxu0 0.0
    %889 = vmatpush1.msra.mxu0 %v418
    %890 = vmatprep.subr.mxu0 0.0
    %891 = vmatpush1.msra.mxu0 %v419
    %892 = vmatprep.subr.mxu0 0.0
    %893 = vmatpush1.msra.mxu0 %v420
    %894 = vmatprep.subr.mxu0 0.0
    %895 = vmatpush1.msra.mxu0 0.0
    %896 = vmatprep.subr.mxu0 0.0
    %897 = vmatpush1.msra.mxu0 0.0
    %898 = vmatprep.subr.mxu0 0.0
    %899 = vmatpush1.msra.mxu0 0.0
    %900 = vmatprep.subr.mxu0 0.0
    %901 = vmatpush1.msra.mxu0 0.0
    %902 = vmatprep.subr.mxu0 0.0
    %903 = vmatpush1.msra.mxu0 0.0
    %904 = vmatprep.subr.mxu0 0.0
    %905 = vmatpush1.msra.mxu0 0.0
    %906 = vmatprep.subr.mxu0 0.0
    %907 = vmatpush1.msra.mxu0 0.0
    %908 = vmatprep.subr.mxu0 0.0
    %909 = vmatpush1.msra.mxu0 0.0
    %910 = vmatprep.subr.mxu0 0.0
    %911 = vmatpush1.msra.mxu0 0.0
    %912 = vmatprep.subr.mxu0 0.0
    %913 = vmatpush1.msra.mxu0 0.0
    %914 = vmatprep.subr.mxu0 0.0
    %915 = vmatpush1.msra.mxu0 0.0
    %916 = vmatprep.subr.mxu0 0.0
    %917 = vmatpush1.msra.mxu0 0.0
    %918 = vmatprep.subr.mxu0 0.0
    %919 = vmatpush1.msra.mxu0 0.0
    %920 = vmatprep.subr.mxu0 0.0
    %921 = vmatpush1.msra.mxu0 0.0
    %922 = vmatprep.subr.mxu0 0.0
    %923 = vmatpush1.msra.mxu0 0.0
    %924 = vmatprep.subr.mxu0 0.0
    %925 = vmatpush1.msra.mxu0 0.0
    %926 = vmatprep.subr.mxu0 0.0
    %927 = vmatpush1.msra.mxu0 0.0
    %928 = vmatprep.subr.mxu0 0.0
    %929 = vmatpush1.msra.mxu0 0.0
    %930 = vmatprep.subr.mxu0 0.0
    %931 = vmatpush1.msra.mxu0 0.0
    %932 = vmatprep.subr.mxu0 0.0
    %933 = vmatpush1.msra.mxu0 0.0
    %934 = vmatprep.subr.mxu0 0.0
    %935 = vmatpush1.msra.mxu0 0.0
    %936 = vmatprep.subr.mxu0 0.0
    %937 = vmatpush1.msra.mxu0 0.0
    %938 = vmatprep.subr.mxu0 0.0
    %939 = vmatpush1.msra.mxu0 0.0
    %940 = vmatprep.subr.mxu0 0.0
    %941 = vmatpush1.msra.mxu0 0.0
    %942 = vmatprep.subr.mxu0 0.0
    %943 = vmatpush1.msra.mxu0 0.0
    %944 = vmatprep.subr.mxu0 0.0
    %945 = vmatpush1.msra.mxu0 0.0
    %946 = vmatprep.subr.mxu0 0.0
    %947 = vmatpush1.msra.mxu0 0.0
    %948 = vmatprep.subr.mxu0 0.0
    %949 = vmatpush1.msra.mxu0 0.0
    %950 = vmatprep.mubr.f32.mxu0 0.0
    %951 = vmatmul.mubr.f32.gmra.mrb[0].mxu0 %v884
    %v952 = vpop.f32.mrb[0].mxu0
    %v953 = vadd.f32 0.0, %v952
    %v954 = vpop.f32.mrb[0].mxu0
    %955 = vdwg.mxu0
    %957 = vrot.lane.b32.xlu0 %v953, 96
    %v958 = vpop.permute.xlu0 %957
    %v960 = vadd.f32 %v344, %v958
    %v961 = vadd.f32 %v413, %v958
    %v962 = vxor.u32 %v960, 2147483648
    %v963 = vxor.u32 %v961, 2147483648
    %v964 = vmul.f32 %v962, 1.442695
    %v965 = vpow.pop %v964
    %v966 = vmul.f32 %v963, 1.442695
    %v967 = vpow.pop %v966
    %v968 = vadd.f32 %v965, 1.0
    %v969 = vadd.f32 %v967, 1.0
    %v970 = vrcp.pop %v968
    %v971 = vmul.f32 1.0, %v970
    %v972 = vrcp.pop %v969
    %v973 = vmul.f32 1.0, %v972
    %v974 = vadd.f32 %v953, %v541
    %976 = vrot.lane.b32.xlu0 %v974, 32
    %v977 = vpop.permute.xlu0 %976
    %v979 = vmul.f32 %v971, %v977
    %981 = vrot.lane.b32.xlu0 %v979, 64
    %v982 = vpop.permute.xlu0 %981
    %v984 = vadd.f32 %v413, %v982
    %v985 = vtanh.pop %v984
    %v986 = vsub.f32 1.0, %v973
    %988 = vrot.lane.b32.xlu0 %v985, 96
    %v989 = vpop.permute.xlu0 %988
    %v991 = vmul.f32 %v986, %v989
    %v993 = vmul.f32 %v973, %v883
    %v994 = vadd.f32 %v991, %v993
    %v996 = vsel %vm200, %v994, 0
    %998 = vmatprep.subr.mxu0 0.0
    %999 = vmatpush1.msra.mxu0 %v417
    %1000 = vmatprep.subr.mxu0 0.0
    %1001 = vmatpush1.msra.mxu0 %v418
    %1002 = vmatprep.subr.mxu0 0.0
    %1003 = vmatpush1.msra.mxu0 %v419
    %1004 = vmatprep.subr.mxu0 0.0
    %1005 = vmatpush1.msra.mxu0 %v420
    %1006 = vmatprep.subr.mxu0 0.0
    %1007 = vmatpush1.msra.mxu0 0.0
    %1008 = vmatprep.subr.mxu0 0.0
    %1009 = vmatpush1.msra.mxu0 0.0
    %1010 = vmatprep.subr.mxu0 0.0
    %1011 = vmatpush1.msra.mxu0 0.0
    %1012 = vmatprep.subr.mxu0 0.0
    %1013 = vmatpush1.msra.mxu0 0.0
    %1014 = vmatprep.subr.mxu0 0.0
    %1015 = vmatpush1.msra.mxu0 0.0
    %1016 = vmatprep.subr.mxu0 0.0
    %1017 = vmatpush1.msra.mxu0 0.0
    %1018 = vmatprep.subr.mxu0 0.0
    %1019 = vmatpush1.msra.mxu0 0.0
    %1020 = vmatprep.subr.mxu0 0.0
    %1021 = vmatpush1.msra.mxu0 0.0
    %1022 = vmatprep.subr.mxu0 0.0
    %1023 = vmatpush1.msra.mxu0 0.0
    %1024 = vmatprep.subr.mxu0 0.0
    %1025 = vmatpush1.msra.mxu0 0.0
    %1026 = vmatprep.subr.mxu0 0.0
    %1027 = vmatpush1.msra.mxu0 0.0
    %1028 = vmatprep.subr.mxu0 0.0
    %1029 = vmatpush1.msra.mxu0 0.0
    %1030 = vmatprep.subr.mxu0 0.0
    %1031 = vmatpush1.msra.mxu0 0.0
    %1032 = vmatprep.subr.mxu0 0.0
    %1033 = vmatpush1.msra.mxu0 0.0
    %1034 = vmatprep.subr.mxu0 0.0
    %1035 = vmatpush1.msra.mxu0 0.0
    %1036 = vmatprep.subr.mxu0 0.0
    %1037 = vmatpush1.msra.mxu0 0.0
    %1038 = vmatprep.subr.mxu0 0.0
    %1039 = vmatpush1.msra.mxu0 0.0
    %1040 = vmatprep.subr.mxu0 0.0
    %1041 = vmatpush1.msra.mxu0 0.0
    %1042 = vmatprep.subr.mxu0 0.0
    %1043 = vmatpush1.msra.mxu0 0.0
    %1044 = vmatprep.subr.mxu0 0.0
    %1045 = vmatpush1.msra.mxu0 0.0
    %1046 = vmatprep.subr.mxu0 0.0
    %1047 = vmatpush1.msra.mxu0 0.0
    %1048 = vmatprep.subr.mxu0 0.0
    %1049 = vmatpush1.msra.mxu0 0.0
    %1050 = vmatprep.subr.mxu0 0.0
    %1051 = vmatpush1.msra.mxu0 0.0
    %1052 = vmatprep.subr.mxu0 0.0
    %1053 = vmatpush1.msra.mxu0 0.0
    %1054 = vmatprep.subr.mxu0 0.0
    %1055 = vmatpush1.msra.mxu0 0.0
    %1056 = vmatprep.subr.mxu0 0.0
    %1057 = vmatpush1.msra.mxu0 0.0
    %1058 = vmatprep.subr.mxu0 0.0
    %1059 = vmatpush1.msra.mxu0 0.0
    %1060 = vmatprep.subr.mxu0 0.0
    %1061 = vmatpush1.msra.mxu0 0.0
    %1062 = vmatprep.mubr.f32.mxu0 0.0
    %1063 = vmatmul.mubr.f32.gmra.mrb[0].mxu0 %v996
    %v1064 = vpop.f32.mrb[0].mxu0
    %v1065 = vadd.f32 0.0, %v1064
    %v1066 = vpop.f32.mrb[0].mxu0
    %1067 = vdwg.mxu0
    %1069 = vrot.lane.b32.xlu0 %v1065, 64
    %v1070 = vpop.permute.xlu0 %1069
    %v1072 = vadd.f32 %v413, %v1070
    %v1073 = vxor.u32 %v1072, 2147483648
    %v1074 = vmul.f32 %v1073, 1.442695
    %v1075 = vpow.pop %v1074
    %v1076 = vadd.f32 %v1075, 1.0
    %v1077 = vrcp.pop %v1076
    %v1078 = vmul.f32 1.0, %v1077
    %v1079 = vadd.f32 %v1065, %v541
    %v1080 = vmul.f32 %v1078, %v1079
    %1082 = vrot.lane.b32.xlu0 %v1080, 64
    %v1083 = vpop.permute.xlu0 %1082
    %v1085 = vadd.f32 %v415, %v1083
    %v1086 = vtanh.pop %v1085
    %v1087 = vsub.f32 1.0, %v1078
    %1089 = vrot.lane.b32.xlu0 %v1086, 96
    %v1090 = vpop.permute.xlu0 %1089
    %v1092 = vmul.f32 %v1087, %v1090
    %1093 = vrot.lane.b32.xlu0 %v994, 96
    %v1094 = vpop.permute.xlu0 %1093
    %v1096 = vmul.f32 %v1078, %v1094
    %v1097 = vadd.f32 %v1092, %v1096
    %1099 = vrot.lane.b32.xlu0 %v1097, 32
    %v1100 = vpop.permute.xlu0 %1099
    %v1101 = vsel %vm200, %v1100, 0
    %1103 = vmatprep.subr.mxu0 0.0
    %1104 = vmatpush1.msra.mxu0 %v417
    %1105 = vmatprep.subr.mxu0 0.0
    %1106 = vmatpush1.msra.mxu0 %v418
    %1107 = vmatprep.subr.mxu0 0.0
    %1108 = vmatpush1.msra.mxu0 %v419
    %1109 = vmatprep.subr.mxu0 0.0
    %1110 = vmatpush1.msra.mxu0 %v420
    %1111 = vmatprep.subr.mxu0 0.0
    %1112 = vmatpush1.msra.mxu0 0.0
    %1113 = vmatprep.subr.mxu0 0.0
    %1114 = vmatpush1.msra.mxu0 0.0
    %1115 = vmatprep.subr.mxu0 0.0
    %1116 = vmatpush1.msra.mxu0 0.0
    %1117 = vmatprep.subr.mxu0 0.0
    %1118 = vmatpush1.msra.mxu0 0.0
    %1119 = vmatprep.subr.mxu0 0.0
    %1120 = vmatpush1.msra.mxu0 0.0
    %1121 = vmatprep.subr.mxu0 0.0
    %1122 = vmatpush1.msra.mxu0 0.0
    %1123 = vmatprep.subr.mxu0 0.0
    %1124 = vmatpush1.msra.mxu0 0.0
    %1125 = vmatprep.subr.mxu0 0.0
    %1126 = vmatpush1.msra.mxu0 0.0
    %1127 = vmatprep.subr.mxu0 0.0
    %1128 = vmatpush1.msra.mxu0 0.0
    %1129 = vmatprep.subr.mxu0 0.0
    %1130 = vmatpush1.msra.mxu0 0.0
    %1131 = vmatprep.subr.mxu0 0.0
    %1132 = vmatpush1.msra.mxu0 0.0
    %1133 = vmatprep.subr.mxu0 0.0
    %1134 = vmatpush1.msra.mxu0 0.0
    %1135 = vmatprep.subr.mxu0 0.0
    %1136 = vmatpush1.msra.mxu0 0.0
    %1137 = vmatprep.subr.mxu0 0.0
    %1138 = vmatpush1.msra.mxu0 0.0
    %1139 = vmatprep.subr.mxu0 0.0
    %1140 = vmatpush1.msra.mxu0 0.0
    %1141 = vmatprep.subr.mxu0 0.0
    %1142 = vmatpush1.msra.mxu0 0.0
    %1143 = vmatprep.subr.mxu0 0.0
    %1144 = vmatpush1.msra.mxu0 0.0
    %1145 = vmatprep.subr.mxu0 0.0
    %1146 = vmatpush1.msra.mxu0 0.0
    %1147 = vmatprep.subr.mxu0 0.0
    %1148 = vmatpush1.msra.mxu0 0.0
    %1149 = vmatprep.subr.mxu0 0.0
    %1150 = vmatpush1.msra.mxu0 0.0
    %1151 = vmatprep.subr.mxu0 0.0
    %1152 = vmatpush1.msra.mxu0 0.0
    %1153 = vmatprep.subr.mxu0 0.0
    %1154 = vmatpush1.msra.mxu0 0.0
    %1155 = vmatprep.subr.mxu0 0.0
    %1156 = vmatpush1.msra.mxu0 0.0
    %1157 = vmatprep.subr.mxu0 0.0
    %1158 = vmatpush1.msra.mxu0 0.0
    %1159 = vmatprep.subr.mxu0 0.0
    %1160 = vmatpush1.msra.mxu0 0.0
    %1161 = vmatprep.subr.mxu0 0.0
    %1162 = vmatpush1.msra.mxu0 0.0
    %1163 = vmatprep.subr.mxu0 0.0
    %1164 = vmatpush1.msra.mxu0 0.0
    %1165 = vmatprep.subr.mxu0 0.0
    %1166 = vmatpush1.msra.mxu0 0.0
    %1167 = vmatprep.mubr.f32.mxu0 0.0
    %1168 = vmatmul.mubr.f32.gmra.mrb[0].mxu0 %v1101
    %v1169 = vpop.f32.mrb[0].mxu0
    %v1170 = vadd.f32 0.0, %v1169
    %v1171 = vpop.f32.mrb[0].mxu0
    %1172 = vdwg.mxu0
    %1174 = vrot.lane.b32.xlu0 %v1170, 32
    %v1175 = vpop.permute.xlu0 %1174
    %v1177 = vadd.f32 %v415, %v1175
    %v1178 = vxor.u32 %v1177, 2147483648
    %v1179 = vmul.f32 %v1178, 1.442695
    %v1180 = vpow.pop %v1179
    %v1181 = vadd.f32 %v1180, 1.0
    %v1182 = vrcp.pop %v1181
    %v1183 = vmul.f32 1.0, %v1182
    %v1184 = vadd.f32 %v1170, %v541
    %1186 = vrot.lane.b32.xlu0 %v1184, 96
    %v1187 = vpop.permute.xlu0 %1186
    %v1189 = vmul.f32 %v1183, %v1187
    %1191 = vrot.lane.b32.xlu0 %v1189, 64
    %v1192 = vpop.permute.xlu0 %1191
    %v1194 = vadd.f32 %v415, %v1192
    %v1195 = vtanh.pop %v1194
    %v1196 = vsub.f32 1.0, %v1183
    %1198 = vrot.lane.b32.xlu0 %v1195, 96
    %v1199 = vpop.permute.xlu0 %1198
    %v1201 = vmul.f32 %v1196, %v1199
    %1202 = vrot.lane.b32.xlu0 %v1097, 96
    %v1203 = vpop.permute.xlu0 %1202
    %v1205 = vmul.f32 %v1183, %v1203
    %v1206 = vadd.f32 %v1201, %v1205
    %v1207 = vld [vmem:[#allocation4] sm:$0xff]
    %v1208 = vld [vmem:[#allocation4 + $0x8] sm:$0xff]
    %v1209 = vld [vmem:[#allocation4 + $0x10] sm:$0xff]
    %v1210 = vld [vmem:[#allocation4 + $0x18] sm:$0xff]
    %v1211 = vld [vmem:[#allocation6] sm:$0x1]
    %v1213 = vlaneseq
    %v1214 = vshrl.u32 %v1213, 7
    %v1215 = vsub.s32 0, %v1214
    %v1216 = vrot.slane %v1211, %v1215
    %1219 = vrot.lane.b32.xlu0 %v1206, 64
    %v1220 = vpop.permute.xlu0 %1219
    %v1221 = vsel %vm200, %v1220, 0
    %1223 = vmatprep.subr.mxu0 0.0
    %1224 = vmatpush1.msra.mxu0 %v1207
    %1225 = vmatprep.subr.mxu0 0.0
    %1226 = vmatpush1.msra.mxu0 %v1208
    %1227 = vmatprep.subr.mxu0 0.0
    %1228 = vmatpush1.msra.mxu0 %v1209
    %1229 = vmatprep.subr.mxu0 0.0
    %1230 = vmatpush1.msra.mxu0 %v1210
    %1231 = vmatprep.subr.mxu0 0.0
    %1232 = vmatpush1.msra.mxu0 0.0
    %1233 = vmatprep.subr.mxu0 0.0
    %1234 = vmatpush1.msra.mxu0 0.0
    %1235 = vmatprep.subr.mxu0 0.0
    %1236 = vmatpush1.msra.mxu0 0.0
    %1237 = vmatprep.subr.mxu0 0.0
    %1238 = vmatpush1.msra.mxu0 0.0
    %1239 = vmatprep.subr.mxu0 0.0
    %1240 = vmatpush1.msra.mxu0 0.0
    %1241 = vmatprep.subr.mxu0 0.0
    %1242 = vmatpush1.msra.mxu0 0.0
    %1243 = vmatprep.subr.mxu0 0.0
    %1244 = vmatpush1.msra.mxu0 0.0
    %1245 = vmatprep.subr.mxu0 0.0
    %1246 = vmatpush1.msra.mxu0 0.0
    %1247 = vmatprep.subr.mxu0 0.0
    %1248 = vmatpush1.msra.mxu0 0.0
    %1249 = vmatprep.subr.mxu0 0.0
    %1250 = vmatpush1.msra.mxu0 0.0
    %1251 = vmatprep.subr.mxu0 0.0
    %1252 = vmatpush1.msra.mxu0 0.0
    %1253 = vmatprep.subr.mxu0 0.0
    %1254 = vmatpush1.msra.mxu0 0.0
    %1255 = vmatprep.subr.mxu0 0.0
    %1256 = vmatpush1.msra.mxu0 0.0
    %1257 = vmatprep.subr.mxu0 0.0
    %1258 = vmatpush1.msra.mxu0 0.0
    %1259 = vmatprep.subr.mxu0 0.0
    %1260 = vmatpush1.msra.mxu0 0.0
    %1261 = vmatprep.subr.mxu0 0.0
    %1262 = vmatpush1.msra.mxu0 0.0
    %1263 = vmatprep.subr.mxu0 0.0
    %1264 = vmatpush1.msra.mxu0 0.0
    %1265 = vmatprep.subr.mxu0 0.0
    %1266 = vmatpush1.msra.mxu0 0.0
    %1267 = vmatprep.subr.mxu0 0.0
    %1268 = vmatpush1.msra.mxu0 0.0
    %1269 = vmatprep.subr.mxu0 0.0
    %1270 = vmatpush1.msra.mxu0 0.0
    %1271 = vmatprep.subr.mxu0 0.0
    %1272 = vmatpush1.msra.mxu0 0.0
    %1273 = vmatprep.subr.mxu0 0.0
    %1274 = vmatpush1.msra.mxu0 0.0
    %1275 = vmatprep.subr.mxu0 0.0
    %1276 = vmatpush1.msra.mxu0 0.0
    %1277 = vmatprep.subr.mxu0 0.0
    %1278 = vmatpush1.msra.mxu0 0.0
    %1279 = vmatprep.subr.mxu0 0.0
    %1280 = vmatpush1.msra.mxu0 0.0
    %1281 = vmatprep.subr.mxu0 0.0
    %1282 = vmatpush1.msra.mxu0 0.0
    %1283 = vmatprep.subr.mxu0 0.0
    %1284 = vmatpush1.msra.mxu0 0.0
    %1285 = vmatprep.subr.mxu0 0.0
    %1286 = vmatpush1.msra.mxu0 0.0
    %1287 = vmatprep.mubr.f32.mxu0 0.0
    %1288 = vmatmul.mubr.f32.gmra.mrb[0].mxu0 %v1221
    %v1289 = vpop.f32.mrb[0].mxu0
    %v1290 = vadd.f32 %v1216, %v1289
    %v1291 = vpop.f32.mrb[0].mxu0
    %1292 = vdwg.mxu0
    %v1293 = vld [vmem:[#allocation10] sm:$0xff]
    %v1294 = vld [vmem:[#allocation10 + $0x8] sm:$0xff]
    %v1295 = vld [vmem:[#allocation10 + $0x10] sm:$0xff]
    %v1296 = vld [vmem:[#allocation10 + $0x18] sm:$0xff]
    %v1297 = vld [vmem:[#allocation12] sm:$0x1]
    %v1299 = vlaneseq
    %v1300 = vshrl.u32 %v1299, 7
    %v1301 = vsub.s32 0, %v1300
    %v1302 = vrot.slane %v1297, %v1301
    %v1303 = vld [vmem:[#allocation9] sm:$0x1]
    %v1304 = vld [vmem:[#allocation7] sm:$0xf]
    %v1306 = vlaneseq
    %v1307 = vshrl.u32 %v1306, 7
    %v1308 = vsub.s32 0, %v1307
    %v1309 = vrot.slane %v1303, %v1308
    %1311 = vrot.lane.b32.xlu0 %v143, 100
    %v1312 = vpop.permute.xlu0 %1311
    %vm1313 = vcmask 31744
    %v1314 = vsel %vm1313, %v1312, 0
    %vm1316 = vcmask 1043456
    %v1318 = vsel %vm1316, %v1304, 0
    %1320 = vmatprep.subr.mxu0 0.0
    %1321 = vmatpush1.msra.mxu0 %v1318
    %1322 = vmatprep.subr.mxu0 0.0
    %1323 = vmatpush1.msra.mxu0 0.0
    %1324 = vmatprep.subr.mxu0 0.0
    %1325 = vmatpush1.msra.mxu0 0.0
    %1326 = vmatprep.subr.mxu0 0.0
    %1327 = vmatpush1.msra.mxu0 0.0
    %1328 = vmatprep.subr.mxu0 0.0
    %1329 = vmatpush1.msra.mxu0 0.0
    %1330 = vmatprep.subr.mxu0 0.0
    %1331 = vmatpush1.msra.mxu0 0.0
    %1332 = vmatprep.subr.mxu0 0.0
    %1333 = vmatpush1.msra.mxu0 0.0
    %1334 = vmatprep.subr.mxu0 0.0
    %1335 = vmatpush1.msra.mxu0 0.0
    %1336 = vmatprep.subr.mxu0 0.0
    %1337 = vmatpush1.msra.mxu0 0.0
    %1338 = vmatprep.subr.mxu0 0.0
    %1339 = vmatpush1.msra.mxu0 0.0
    %1340 = vmatprep.subr.mxu0 0.0
    %1341 = vmatpush1.msra.mxu0 0.0
    %1342 = vmatprep.subr.mxu0 0.0
    %1343 = vmatpush1.msra.mxu0 0.0
    %1344 = vmatprep.subr.mxu0 0.0
    %1345 = vmatpush1.msra.mxu0 0.0
    %1346 = vmatprep.subr.mxu0 0.0
    %1347 = vmatpush1.msra.mxu0 0.0
    %1348 = vmatprep.subr.mxu0 0.0
    %1349 = vmatpush1.msra.mxu0 0.0
    %1350 = vmatprep.subr.mxu0 0.0
    %1351 = vmatpush1.msra.mxu0 0.0
    %1352 = vmatprep.subr.mxu0 0.0
    %1353 = vmatpush1.msra.mxu0 0.0
    %1354 = vmatprep.subr.mxu0 0.0
    %1355 = vmatpush1.msra.mxu0 0.0
    %1356 = vmatprep.subr.mxu0 0.0
    %1357 = vmatpush1.msra.mxu0 0.0
    %1358 = vmatprep.subr.mxu0 0.0
    %1359 = vmatpush1.msra.mxu0 0.0
    %1360 = vmatprep.subr.mxu0 0.0
    %1361 = vmatpush1.msra.mxu0 0.0
    %1362 = vmatprep.subr.mxu0 0.0
    %1363 = vmatpush1.msra.mxu0 0.0
    %1364 = vmatprep.subr.mxu0 0.0
    %1365 = vmatpush1.msra.mxu0 0.0
    %1366 = vmatprep.subr.mxu0 0.0
    %1367 = vmatpush1.msra.mxu0 0.0
    %1368 = vmatprep.subr.mxu0 0.0
    %1369 = vmatpush1.msra.mxu0 0.0
    %1370 = vmatprep.subr.mxu0 0.0
    %1371 = vmatpush1.msra.mxu0 0.0
    %1372 = vmatprep.subr.mxu0 0.0
    %1373 = vmatpush1.msra.mxu0 0.0
    %1374 = vmatprep.subr.mxu0 0.0
    %1375 = vmatpush1.msra.mxu0 0.0
    %1376 = vmatprep.subr.mxu0 0.0
    %1377 = vmatpush1.msra.mxu0 0.0
    %1378 = vmatprep.subr.mxu0 0.0
    %1379 = vmatpush1.msra.mxu0 0.0
    %1380 = vmatprep.subr.mxu0 0.0
    %1381 = vmatpush1.msra.mxu0 0.0
    %1382 = vmatprep.subr.mxu0 0.0
    %1383 = vmatpush1.msra.mxu0 0.0
    %1384 = vmatprep.mubr.f32.mxu0 0.0
    %1385 = vmatmul.mubr.f32.gmra.mrb[0].mxu0 %v1314
    %v1386 = vpop.f32.mrb[0].mxu0
    %v1387 = vadd.f32 %v1309, %v1386
    %v1388 = vpop.f32.mrb[0].mxu0
    %1389 = vdwg.mxu0
    %v1391 = vsel %vm200, %v1290, 0
    %1393 = vmatprep.subr.mxu0 0.0
    %1394 = vmatpush1.msra.mxu0 %v1293
    %1395 = vmatprep.subr.mxu0 0.0
    %1396 = vmatpush1.msra.mxu0 %v1294
    %1397 = vmatprep.subr.mxu0 0.0
    %1398 = vmatpush1.msra.mxu0 %v1295
    %1399 = vmatprep.subr.mxu0 0.0
    %1400 = vmatpush1.msra.mxu0 %v1296
    %1401 = vmatprep.subr.mxu0 0.0
    %1402 = vmatpush1.msra.mxu0 0.0
    %1403 = vmatprep.subr.mxu0 0.0
    %1404 = vmatpush1.msra.mxu0 0.0
    %1405 = vmatprep.subr.mxu0 0.0
    %1406 = vmatpush1.msra.mxu0 0.0
    %1407 = vmatprep.subr.mxu0 0.0
    %1408 = vmatpush1.msra.mxu0 0.0
    %1409 = vmatprep.subr.mxu0 0.0
    %1410 = vmatpush1.msra.mxu0 0.0
    %1411 = vmatprep.subr.mxu0 0.0
    %1412 = vmatpush1.msra.mxu0 0.0
    %1413 = vmatprep.subr.mxu0 0.0
    %1414 = vmatpush1.msra.mxu0 0.0
    %1415 = vmatprep.subr.mxu0 0.0
    %1416 = vmatpush1.msra.mxu0 0.0
    %1417 = vmatprep.subr.mxu0 0.0
    %1418 = vmatpush1.msra.mxu0 0.0
    %1419 = vmatprep.subr.mxu0 0.0
    %1420 = vmatpush1.msra.mxu0 0.0
    %1421 = vmatprep.subr.mxu0 0.0
    %1422 = vmatpush1.msra.mxu0 0.0
    %1423 = vmatprep.subr.mxu0 0.0
    %1424 = vmatpush1.msra.mxu0 0.0
    %1425 = vmatprep.subr.mxu0 0.0
    %1426 = vmatpush1.msra.mxu0 0.0
    %1427 = vmatprep.subr.mxu0 0.0
    %1428 = vmatpush1.msra.mxu0 0.0
    %1429 = vmatprep.subr.mxu0 0.0
    %1430 = vmatpush1.msra.mxu0 0.0
    %1431 = vmatprep.subr.mxu0 0.0
    %1432 = vmatpush1.msra.mxu0 0.0
    %1433 = vmatprep.subr.mxu0 0.0
    %1434 = vmatpush1.msra.mxu0 0.0
    %1435 = vmatprep.subr.mxu0 0.0
    %1436 = vmatpush1.msra.mxu0 0.0
    %1437 = vmatprep.subr.mxu0 0.0
    %1438 = vmatpush1.msra.mxu0 0.0
    %1439 = vmatprep.subr.mxu0 0.0
    %1440 = vmatpush1.msra.mxu0 0.0
    %1441 = vmatprep.subr.mxu0 0.0
    %1442 = vmatpush1.msra.mxu0 0.0
    %1443 = vmatprep.subr.mxu0 0.0
    %1444 = vmatpush1.msra.mxu0 0.0
    %1445 = vmatprep.subr.mxu0 0.0
    %1446 = vmatpush1.msra.mxu0 0.0
    %1447 = vmatprep.subr.mxu0 0.0
    %1448 = vmatpush1.msra.mxu0 0.0
    %1449 = vmatprep.subr.mxu0 0.0
    %1450 = vmatpush1.msra.mxu0 0.0
    %1451 = vmatprep.subr.mxu0 0.0
    %1452 = vmatpush1.msra.mxu0 0.0
    %1453 = vmatprep.subr.mxu0 0.0
    %1454 = vmatpush1.msra.mxu0 0.0
    %1455 = vmatprep.subr.mxu0 0.0
    %1456 = vmatpush1.msra.mxu0 0.0
    %1457 = vmatprep.mubr.f32.mxu0 0.0
    %1458 = vmatmul.mubr.f32.gmra.mrb[0].mxu0 %v1391
    %v1459 = vpop.f32.mrb[0].mxu0
    %v1460 = vadd.f32 0.0, %v1459
    %v1461 = vpop.f32.mrb[0].mxu0
    %1462 = vdwg.mxu0
    %v1463 = vadd.f32 %v1387, %v1460
    %v1464 = vxor.u32 %v1463, 2147483648
    %v1465 = vmul.f32 %v1464, 1.442695
    %v1466 = vpow.pop %v1465
    %v1467 = vadd.f32 %v1466, 1.0
    %v1468 = vrcp.pop %v1467
    %v1469 = vmul.f32 1.0, %v1468
    %1470 = vrot.lane.b32.xlu0 %v1302, 64
    %v1471 = vpop.permute.xlu0 %1470
    %v1473 = vadd.f32 %v1460, %v1471
    %1475 = vrot.lane.b32.xlu0 %v1473, 64
    %v1476 = vpop.permute.xlu0 %1475
    %v1478 = vmul.f32 %v1469, %v1476
    %1480 = vrot.lane.b32.xlu0 %v1478, 64
    %v1481 = vpop.permute.xlu0 %1480
    %v1483 = vadd.f32 %v1387, %v1481
    %v1484 = vtanh.pop %v1483
    %v1485 = vsub.f32 1.0, %v1469
    %1487 = vrot.lane.b32.xlu0 %v1484, 96
    %v1488 = vpop.permute.xlu0 %1487
    %v1490 = vmul.f32 %v1485, %v1488
    %1491 = vrot.lane.b32.xlu0 %v1290, 32
    %v1492 = vpop.permute.xlu0 %1491
    %v1494 = vmul.f32 %v1469, %v1492
    %v1495 = vadd.f32 %v1490, %v1494
    %1497 = vrot.lane.b32.xlu0 %v1495, 96
    %v1498 = vpop.permute.xlu0 %1497
    %v1499 = vsel %vm200, %v1498, 0
    %1501 = vmatprep.subr.mxu0 0.0
    %1502 = vmatpush1.msra.mxu0 %v1293
    %1503 = vmatprep.subr.mxu0 0.0
    %1504 = vmatpush1.msra.mxu0 %v1294
    %1505 = vmatprep.subr.mxu0 0.0
    %1506 = vmatpush1.msra.mxu0 %v1295
    %1507 = vmatprep.subr.mxu0 0.0
    %1508 = vmatpush1.msra.mxu0 %v1296
    %1509 = vmatprep.subr.mxu0 0.0
    %1510 = vmatpush1.msra.mxu0 0.0
    %1511 = vmatprep.subr.mxu0 0.0
    %1512 = vmatpush1.msra.mxu0 0.0
    %1513 = vmatprep.subr.mxu0 0.0
    %1514 = vmatpush1.msra.mxu0 0.0
    %1515 = vmatprep.subr.mxu0 0.0
    %1516 = vmatpush1.msra.mxu0 0.0
    %1517 = vmatprep.subr.mxu0 0.0
    %1518 = vmatpush1.msra.mxu0 0.0
    %1519 = vmatprep.subr.mxu0 0.0
    %1520 = vmatpush1.msra.mxu0 0.0
    %1521 = vmatprep.subr.mxu0 0.0
    %1522 = vmatpush1.msra.mxu0 0.0
    %1523 = vmatprep.subr.mxu0 0.0
    %1524 = vmatpush1.msra.mxu0 0.0
    %1525 = vmatprep.subr.mxu0 0.0
    %1526 = vmatpush1.msra.mxu0 0.0
    %1527 = vmatprep.subr.mxu0 0.0
    %1528 = vmatpush1.msra.mxu0 0.0
    %1529 = vmatprep.subr.mxu0 0.0
    %1530 = vmatpush1.msra.mxu0 0.0
    %1531 = vmatprep.subr.mxu0 0.0
    %1532 = vmatpush1.msra.mxu0 0.0
    %1533 = vmatprep.subr.mxu0 0.0
    %1534 = vmatpush1.msra.mxu0 0.0
    %1535 = vmatprep.subr.mxu0 0.0
    %1536 = vmatpush1.msra.mxu0 0.0
    %1537 = vmatprep.subr.mxu0 0.0
    %1538 = vmatpush1.msra.mxu0 0.0
    %1539 = vmatprep.subr.mxu0 0.0
    %1540 = vmatpush1.msra.mxu0 0.0
    %1541 = vmatprep.subr.mxu0 0.0
    %1542 = vmatpush1.msra.mxu0 0.0
    %1543 = vmatprep.subr.mxu0 0.0
    %1544 = vmatpush1.msra.mxu0 0.0
    %1545 = vmatprep.subr.mxu0 0.0
    %1546 = vmatpush1.msra.mxu0 0.0
    %1547 = vmatprep.subr.mxu0 0.0
    %1548 = vmatpush1.msra.mxu0 0.0
    %1549 = vmatprep.subr.mxu0 0.0
    %1550 = vmatpush1.msra.mxu0 0.0
    %1551 = vmatprep.subr.mxu0 0.0
    %1552 = vmatpush1.msra.mxu0 0.0
    %1553 = vmatprep.subr.mxu0 0.0
    %1554 = vmatpush1.msra.mxu0 0.0
    %1555 = vmatprep.subr.mxu0 0.0
    %1556 = vmatpush1.msra.mxu0 0.0
    %1557 = vmatprep.subr.mxu0 0.0
    %1558 = vmatpush1.msra.mxu0 0.0
    %1559 = vmatprep.subr.mxu0 0.0
    %1560 = vmatpush1.msra.mxu0 0.0
    %1561 = vmatprep.subr.mxu0 0.0
    %1562 = vmatpush1.msra.mxu0 0.0
    %1563 = vmatprep.subr.mxu0 0.0
    %1564 = vmatpush1.msra.mxu0 0.0
    %1565 = vmatprep.mubr.f32.mxu0 0.0
    %1566 = vmatmul.mubr.f32.gmra.mrb[0].mxu0 %v1499
    %v1567 = vpop.f32.mrb[0].mxu0
    %v1568 = vadd.f32 0.0, %v1567
    %v1569 = vpop.f32.mrb[0].mxu0
    %1570 = vdwg.mxu0
    %v1571 = vadd.f32 %v1309, %v1568
    %v1572 = vxor.u32 %v1571, 2147483648
    %v1573 = vmul.f32 %v1572, 1.442695
    %v1574 = vpow.pop %v1573
    %v1575 = vadd.f32 %v1574, 1.0
    %v1576 = vrcp.pop %v1575
    %v1577 = vmul.f32 1.0, %v1576
    %v1578 = vadd.f32 %v1568, %v1471
    %1580 = vrot.lane.b32.xlu0 %v1578, 64
    %v1581 = vpop.permute.xlu0 %1580
    %v1583 = vmul.f32 %v1577, %v1581
    %1585 = vrot.lane.b32.xlu0 %v1583, 64
    %v1586 = vpop.permute.xlu0 %1585
    %v1588 = vadd.f32 %v1309, %v1586
    %v1589 = vtanh.pop %v1588
    %v1590 = vsub.f32 1.0, %v1577
    %1592 = vrot.lane.b32.xlu0 %v1589, 96
    %v1593 = vpop.permute.xlu0 %1592
    %v1595 = vmul.f32 %v1590, %v1593
    %v1596 = vmul.f32 %v1577, %v1495
    %v1597 = vadd.f32 %v1595, %v1596
    %1599 = vrot.lane.b32.xlu0 %v1597, 96
    %v1600 = vpop.permute.xlu0 %1599
    %v1601 = vsel %vm200, %v1600, 0
    %1603 = vmatprep.subr.mxu0 0.0
    %1604 = vmatpush1.msra.mxu0 %v1293
    %1605 = vmatprep.subr.mxu0 0.0
    %1606 = vmatpush1.msra.mxu0 %v1294
    %1607 = vmatprep.subr.mxu0 0.0
    %1608 = vmatpush1.msra.mxu0 %v1295
    %1609 = vmatprep.subr.mxu0 0.0
    %1610 = vmatpush1.msra.mxu0 %v1296
    %1611 = vmatprep.subr.mxu0 0.0
    %1612 = vmatpush1.msra.mxu0 0.0
    %1613 = vmatprep.subr.mxu0 0.0
    %1614 = vmatpush1.msra.mxu0 0.0
    %1615 = vmatprep.subr.mxu0 0.0
    %1616 = vmatpush1.msra.mxu0 0.0
    %1617 = vmatprep.subr.mxu0 0.0
    %1618 = vmatpush1.msra.mxu0 0.0
    %1619 = vmatprep.subr.mxu0 0.0
    %1620 = vmatpush1.msra.mxu0 0.0
    %1621 = vmatprep.subr.mxu0 0.0
    %1622 = vmatpush1.msra.mxu0 0.0
    %1623 = vmatprep.subr.mxu0 0.0
    %1624 = vmatpush1.msra.mxu0 0.0
    %1625 = vmatprep.subr.mxu0 0.0
    %1626 = vmatpush1.msra.mxu0 0.0
    %1627 = vmatprep.subr.mxu0 0.0
    %1628 = vmatpush1.msra.mxu0 0.0
    %1629 = vmatprep.subr.mxu0 0.0
    %1630 = vmatpush1.msra.mxu0 0.0
    %1631 = vmatprep.subr.mxu0 0.0
    %1632 = vmatpush1.msra.mxu0 0.0
    %1633 = vmatprep.subr.mxu0 0.0
    %1634 = vmatpush1.msra.mxu0 0.0
    %1635 = vmatprep.subr.mxu0 0.0
    %1636 = vmatpush1.msra.mxu0 0.0
    %1637 = vmatprep.subr.mxu0 0.0
    %1638 = vmatpush1.msra.mxu0 0.0
    %1639 = vmatprep.subr.mxu0 0.0
    %1640 = vmatpush1.msra.mxu0 0.0
    %1641 = vmatprep.subr.mxu0 0.0
    %1642 = vmatpush1.msra.mxu0 0.0
    %1643 = vmatprep.subr.mxu0 0.0
    %1644 = vmatpush1.msra.mxu0 0.0
    %1645 = vmatprep.subr.mxu0 0.0
    %1646 = vmatpush1.msra.mxu0 0.0
    %1647 = vmatprep.subr.mxu0 0.0
    %1648 = vmatpush1.msra.mxu0 0.0
    %1649 = vmatprep.subr.mxu0 0.0
    %1650 = vmatpush1.msra.mxu0 0.0
    %1651 = vmatprep.subr.mxu0 0.0
    %1652 = vmatpush1.msra.mxu0 0.0
    %1653 = vmatprep.subr.mxu0 0.0
    %1654 = vmatpush1.msra.mxu0 0.0
    %1655 = vmatprep.subr.mxu0 0.0
    %1656 = vmatpush1.msra.mxu0 0.0
    %1657 = vmatprep.subr.mxu0 0.0
    %1658 = vmatpush1.msra.mxu0 0.0
    %1659 = vmatprep.subr.mxu0 0.0
    %1660 = vmatpush1.msra.mxu0 0.0
    %1661 = vmatprep.subr.mxu0 0.0
    %1662 = vmatpush1.msra.mxu0 0.0
    %1663 = vmatprep.subr.mxu0 0.0
    %1664 = vmatpush1.msra.mxu0 0.0
    %1665 = vmatprep.subr.mxu0 0.0
    %1666 = vmatpush1.msra.mxu0 0.0
    %1667 = vmatprep.mubr.f32.mxu0 0.0
    %1668 = vmatmul.mubr.f32.gmra.mrb[0].mxu0 %v1601
    %v1669 = vpop.f32.mrb[0].mxu0
    %v1670 = vadd.f32 0.0, %v1669
    %v1671 = vpop.f32.mrb[0].mxu0
    %1672 = vdwg.mxu0
    %v1673 = vadd.f32 %v1309, %v1670
    %v1674 = vxor.u32 %v1673, 2147483648
    %v1675 = vmul.f32 %v1674, 1.442695
    %v1676 = vpow.pop %v1675
    %v1677 = vadd.f32 %v1676, 1.0
    %v1678 = vrcp.pop %v1677
    %v1679 = vmul.f32 1.0, %v1678
    %v1680 = vadd.f32 %v1670, %v1471
    %1682 = vrot.lane.b32.xlu0 %v1680, 64
    %v1683 = vpop.permute.xlu0 %1682
    %v1685 = vmul.f32 %v1679, %v1683
    %1687 = vrot.lane.b32.xlu0 %v1685, 64
    %v1688 = vpop.permute.xlu0 %1687
    %v1690 = vadd.f32 %v1309, %v1688
    %v1691 = vtanh.pop %v1690
    %v1692 = vsub.f32 1.0, %v1679
    %1694 = vrot.lane.b32.xlu0 %v1691, 96
    %v1695 = vpop.permute.xlu0 %1694
    %v1697 = vmul.f32 %v1692, %v1695
    %v1698 = vmul.f32 %v1679, %v1597
    %v1699 = vadd.f32 %v1697, %v1698
    %1701 = vrot.lane.b32.xlu0 %v1699, 96
    %v1702 = vpop.permute.xlu0 %1701
    %v1703 = vsel %vm200, %v1702, 0
    %1705 = vmatprep.subr.mxu0 0.0
    %1706 = vmatpush1.msra.mxu0 %v1293
    %1707 = vmatprep.subr.mxu0 0.0
    %1708 = vmatpush1.msra.mxu0 %v1294
    %1709 = vmatprep.subr.mxu0 0.0
    %1710 = vmatpush1.msra.mxu0 %v1295
    %1711 = vmatprep.subr.mxu0 0.0
    %1712 = vmatpush1.msra.mxu0 %v1296
    %1713 = vmatprep.subr.mxu0 0.0
    %1714 = vmatpush1.msra.mxu0 0.0
    %1715 = vmatprep.subr.mxu0 0.0
    %1716 = vmatpush1.msra.mxu0 0.0
    %1717 = vmatprep.subr.mxu0 0.0
    %1718 = vmatpush1.msra.mxu0 0.0
    %1719 = vmatprep.subr.mxu0 0.0
    %1720 = vmatpush1.msra.mxu0 0.0
    %1721 = vmatprep.subr.mxu0 0.0
    %1722 = vmatpush1.msra.mxu0 0.0
    %1723 = vmatprep.subr.mxu0 0.0
    %1724 = vmatpush1.msra.mxu0 0.0
    %1725 = vmatprep.subr.mxu0 0.0
    %1726 = vmatpush1.msra.mxu0 0.0
    %1727 = vmatprep.subr.mxu0 0.0
    %1728 = vmatpush1.msra.mxu0 0.0
    %1729 = vmatprep.subr.mxu0 0.0
    %1730 = vmatpush1.msra.mxu0 0.0
    %1731 = vmatprep.subr.mxu0 0.0
    %1732 = vmatpush1.msra.mxu0 0.0
    %1733 = vmatprep.subr.mxu0 0.0
    %1734 = vmatpush1.msra.mxu0 0.0
    %1735 = vmatprep.subr.mxu0 0.0
    %1736 = vmatpush1.msra.mxu0 0.0
    %1737 = vmatprep.subr.mxu0 0.0
    %1738 = vmatpush1.msra.mxu0 0.0
    %1739 = vmatprep.subr.mxu0 0.0
    %1740 = vmatpush1.msra.mxu0 0.0
    %1741 = vmatprep.subr.mxu0 0.0
    %1742 = vmatpush1.msra.mxu0 0.0
    %1743 = vmatprep.subr.mxu0 0.0
    %1744 = vmatpush1.msra.mxu0 0.0
    %1745 = vmatprep.subr.mxu0 0.0
    %1746 = vmatpush1.msra.mxu0 0.0
    %1747 = vmatprep.subr.mxu0 0.0
    %1748 = vmatpush1.msra.mxu0 0.0
    %1749 = vmatprep.subr.mxu0 0.0
    %1750 = vmatpush1.msra.mxu0 0.0
    %1751 = vmatprep.subr.mxu0 0.0
    %1752 = vmatpush1.msra.mxu0 0.0
    %1753 = vmatprep.subr.mxu0 0.0
    %1754 = vmatpush1.msra.mxu0 0.0
    %1755 = vmatprep.subr.mxu0 0.0
    %1756 = vmatpush1.msra.mxu0 0.0
    %1757 = vmatprep.subr.mxu0 0.0
    %1758 = vmatpush1.msra.mxu0 0.0
    %1759 = vmatprep.subr.mxu0 0.0
    %1760 = vmatpush1.msra.mxu0 0.0
    %1761 = vmatprep.subr.mxu0 0.0
    %1762 = vmatpush1.msra.mxu0 0.0
    %1763 = vmatprep.subr.mxu0 0.0
    %1764 = vmatpush1.msra.mxu0 0.0
    %1765 = vmatprep.subr.mxu0 0.0
    %1766 = vmatpush1.msra.mxu0 0.0
    %1767 = vmatprep.subr.mxu0 0.0
    %1768 = vmatpush1.msra.mxu0 0.0
    %1769 = vmatprep.mubr.f32.mxu0 0.0
    %1770 = vmatmul.mubr.f32.gmra.mrb[0].mxu0 %v1703
    %v1771 = vpop.f32.mrb[0].mxu0
    %v1772 = vadd.f32 0.0, %v1771
    %v1773 = vpop.f32.mrb[0].mxu0
    %1774 = vdwg.mxu0
    %v1775 = vadd.f32 %v1309, %v1772
    %v1776 = vxor.u32 %v1775, 2147483648
    %v1777 = vmul.f32 %v1776, 1.442695
    %v1778 = vpow.pop %v1777
    %v1779 = vadd.f32 %v1778, 1.0
    %v1780 = vrcp.pop %v1779
    %v1781 = vmul.f32 1.0, %v1780
    %v1782 = vadd.f32 %v1772, %v1471
    %1784 = vrot.lane.b32.xlu0 %v1782, 64
    %v1785 = vpop.permute.xlu0 %1784
    %v1787 = vmul.f32 %v1781, %v1785
    %1789 = vrot.lane.b32.xlu0 %v1787, 64
    %v1790 = vpop.permute.xlu0 %1789
    %v1792 = vadd.f32 %v1309, %v1790
    %v1793 = vtanh.pop %v1792
    %v1794 = vsub.f32 1.0, %v1781
    %1796 = vrot.lane.b32.xlu0 %v1793, 96
    %v1797 = vpop.permute.xlu0 %1796
    %v1799 = vmul.f32 %v1794, %v1797
    %v1800 = vmul.f32 %v1781, %v1699
    %v1801 = vadd.f32 %v1799, %v1800
    %1803 = vrot.lane.b32.xlu0 %v1699, 32
    %v1804 = vpop.permute.xlu0 %1803
    %1807 = vrot.lane.b32.xlu0 %v1801, 64
    %v1808 = vpop.permute.xlu0 %1807
    %v1810 = vsel %vm200, %v1498, %v1597
    %vm1811 = vcmask 523264
    %v1812 = vsel %vm1811, %v1810, %v1804
    %vm1813 = vcmask 785408
    %v1814 = vsel %vm1813, %v1812, %v1808
    %v1815 = vld [vmem:[%s11] sm:$0xff]
    %v1816 = vld [vmem:[%s11 + $0x8] sm:$0xff]
    %v1817 = vld [vmem:[%s11 + $0x10] sm:$0xff]
    %v1818 = vld [vmem:[%s11 + $0x18] sm:$0xff]
    %v1819 = vld [vmem:[%s11 + $0x20] sm:$0xff]
    %v1820 = vld [vmem:[%s11 + $0x28] sm:$0xff]
    %v1821 = vld [vmem:[%s11 + $0x30] sm:$0xff]
    %v1822 = vld [vmem:[%s11 + $0x38] sm:$0xff]
    %v1823 = vld [vmem:[%s11 + $0x40] sm:$0xff]
    %v1824 = vld [vmem:[%s11 + $0x48] sm:$0xff]
    %v1825 = vld [vmem:[%s11 + $0x50] sm:$0xff]
    %v1826 = vld [vmem:[%s11 + $0x58] sm:$0xff]
    %v1827 = vld [vmem:[%s11 + $0x60] sm:$0xff]
    %v1828 = vld [vmem:[%s11 + $0x68] sm:$0xff]
    %v1829 = vld [vmem:[%s11 + $0x70] sm:$0xff]
    %v1830 = vld [vmem:[%s11 + $0x78] sm:$0xff]
    %v1831 = vld [vmem:[#allocation13] sm:$0x1]
    %v1833 = vlaneseq
    %v1834 = vshrl.u32 %v1833, 7
    %v1835 = vsub.s32 0, %v1834
    %v1836 = vrot.slane %v1831, %v1835
    %1838 = vmatprep.subr.mxu0 0.0
    %1839 = vmatpush1.msra.mxu0 %v1815
    %1840 = vmatprep.subr.mxu0 0.0
    %1841 = vmatpush1.msra.mxu0 %v1816
    %1842 = vmatprep.subr.mxu0 0.0
    %1843 = vmatpush1.msra.mxu0 %v1817
    %1844 = vmatprep.subr.mxu0 0.0
    %1845 = vmatpush1.msra.mxu0 %v1818
    %1846 = vmatprep.subr.mxu0 0.0
    %1847 = vmatpush1.msra.mxu0 %v1819
    %1848 = vmatprep.subr.mxu0 0.0
    %1849 = vmatpush1.msra.mxu0 %v1820
    %1850 = vmatprep.subr.mxu0 0.0
    %1851 = vmatpush1.msra.mxu0 %v1821
    %1852 = vmatprep.subr.mxu0 0.0
    %1853 = vmatpush1.msra.mxu0 %v1822
    %1854 = vmatprep.subr.mxu0 0.0
    %1855 = vmatpush1.msra.mxu0 %v1823
    %1856 = vmatprep.subr.mxu0 0.0
    %1857 = vmatpush1.msra.mxu0 %v1824
    %1858 = vmatprep.subr.mxu0 0.0
    %1859 = vmatpush1.msra.mxu0 %v1825
    %1860 = vmatprep.subr.mxu0 0.0
    %1861 = vmatpush1.msra.mxu0 %v1826
    %1862 = vmatprep.subr.mxu0 0.0
    %1863 = vmatpush1.msra.mxu0 %v1827
    %1864 = vmatprep.subr.mxu0 0.0
    %1865 = vmatpush1.msra.mxu0 %v1828
    %1866 = vmatprep.subr.mxu0 0.0
    %1867 = vmatpush1.msra.mxu0 %v1829
    %1868 = vmatprep.subr.mxu0 0.0
    %1869 = vmatpush1.msra.mxu0 %v1830
    %1870 = vmatprep.subr.mxu0 0.0
    %1871 = vmatpush1.msra.mxu0 0.0
    %1872 = vmatprep.subr.mxu0 0.0
    %1873 = vmatpush1.msra.mxu0 0.0
    %1874 = vmatprep.subr.mxu0 0.0
    %1875 = vmatpush1.msra.mxu0 0.0
    %1876 = vmatprep.subr.mxu0 0.0
    %1877 = vmatpush1.msra.mxu0 0.0
    %1878 = vmatprep.subr.mxu0 0.0
    %1879 = vmatpush1.msra.mxu0 0.0
    %1880 = vmatprep.subr.mxu0 0.0
    %1881 = vmatpush1.msra.mxu0 0.0
    %1882 = vmatprep.subr.mxu0 0.0
    %1883 = vmatpush1.msra.mxu0 0.0
    %1884 = vmatprep.subr.mxu0 0.0
    %1885 = vmatpush1.msra.mxu0 0.0
    %1886 = vmatprep.subr.mxu0 0.0
    %1887 = vmatpush1.msra.mxu0 0.0
    %1888 = vmatprep.subr.mxu0 0.0
    %1889 = vmatpush1.msra.mxu0 0.0
    %1890 = vmatprep.subr.mxu0 0.0
    %1891 = vmatpush1.msra.mxu0 0.0
    %1892 = vmatprep.subr.mxu0 0.0
    %1893 = vmatpush1.msra.mxu0 0.0
    %1894 = vmatprep.subr.mxu0 0.0
    %1895 = vmatpush1.msra.mxu0 0.0
    %1896 = vmatprep.subr.mxu0 0.0
    %1897 = vmatpush1.msra.mxu0 0.0
    %1898 = vmatprep.subr.mxu0 0.0
    %1899 = vmatpush1.msra.mxu0 0.0
    %1900 = vmatprep.subr.mxu0 0.0
    %1901 = vmatpush1.msra.mxu0 0.0
    %1902 = vmatprep.mubr.f32.mxu0 0.0
    %1903 = vmatmul.mubr.f32.gmra.mrb[0].mxu0 %v1814
    %v1904 = vpop.f32.mrb[0].mxu0
    %v1905 = vadd.f32 %v1836, %v1904
    %v1906 = vpop.f32.mrb[0].mxu0
    %1907 = vdwg.mxu0
    %vm1908 = vcmask 123904
    %1909 = vst.msk [vmem:[%s13] sm:$0x3] %vm1908, %v1905
    // Predicated region
    $region86: #{seq2seq_forward.1} parent=1 // pred_check
      _
    $region87: #{seq2seq_forward.1} parent=1 // pred_check_branch
      %1911 = sbr.rel (0) target = $region89
    $region88: #{seq2seq_forward.1} parent=1 // pred_region
      _
    $region89: #{seq2seq_forward.1} parent=1 // pred_fallthru
      _
    // Predicated region
    $region90: #{seq2seq_forward.1} parent=1 // pred_check
      _
    $region91: #{seq2seq_forward.1} parent=1 // pred_check_branch
      %1913 = sbr.rel (0) target = $region93
    $region92: #{seq2seq_forward.1} parent=1 // pred_region
      _
    $region93: #{seq2seq_forward.1} parent=1 // pred_fallthru
      _
    %1914 = vsyncpa [#allocation3], 1
    %1915 = vsyncpa [#allocation5], 1
    %1916 = vsyncpa [#allocation8], 1
    %1917 = vsyncpa [#allocation11], 1
    %1918 = vsyncpa [#allocation14], 1

</llo_original>
